<compile_context>
chip_gen: v7x
topology: tpu7x:2x2x1
jax: 0.10.0
libtpu: 0.0.40
codegen_flags: <defaults>
</compile_context>

<pallas_src>
import functools

import jax
import jax.numpy as jnp
from jax.experimental import pallas as pl
from jax.experimental.pallas import tpu as pltpu

EPS = 1e-5  # nn.LayerNorm default


def _round_up(x, m):
    return (x + m - 1) // m * m


@functools.lru_cache(maxsize=1)
def _chip_profile():
    """Return (default_tile_rows, vmem_cap_bytes, n_tensorcores) for this TPU.

    tile_rows targets the MXU/HBM roofline crossover on the streamed weight
    (~714 rows on v6e, ~310 on v7x, ~240 on v5e); the VMEM cap leaves headroom
    below physical (128 MiB on v5e/v6e, 64 MiB on v7x) for compiler scratch.
    """
    kind = ""
    try:
        kind = jax.devices()[0].device_kind.lower()
    except Exception:
        pass
    if "v7" in kind:
        tr, cap, cores = 512, 56 * 1024 * 1024, 2
    elif "v6" in kind:
        tr, cap, cores = 1024, 104 * 1024 * 1024, 1
    elif "v5" in kind:
        tr, cap, cores = 256, 104 * 1024 * 1024, 1
    else:
        tr, cap, cores = 256, 56 * 1024 * 1024, 1  # conservative fallback
    try:
        vmem_cap = int(pltpu.get_tpu_info().vmem_capacity_bytes)
        cap = min(cap, max(32 * 1024 * 1024, vmem_cap - 8 * 1024 * 1024))
    except Exception:
        pass
    return tr, cap, cores


def pernorm_kernel(x_ref, g_ref, b_ref, w_ref, wb_ref, o_ref, y_ref):
    # Grid: (row tile i [parallel], H tile j [arbitrary, innermost]).
    # x_ref: (tr, D), g_ref/b_ref: (1, D) f32, w_ref: (D, tn),
    # wb_ref: (1, tn) f32, o_ref: (tr, tn), y_ref: (tr, D) scratch (w.dtype).
    j = pl.program_id(1)

    # LayerNorm is computed once per row tile and cached in y_ref; the j > 0
    # steps only run the MXU matmul against the next weight tile.
    @pl.when(j == 0)
    def _():
        x = x_ref[...].astype(jnp.float32)
        # One-pass moments: E[x^2] - E[x]^2 (single elementwise pass over the
        # tile, two cross-lane reductions). Clamp guards tiny negative rounding.
        mean = jnp.mean(x, axis=-1, keepdims=True)
        mean_sq = jnp.mean(x * x, axis=-1, keepdims=True)
        var = jnp.maximum(mean_sq - mean * mean, 0.0)
        inv = jax.lax.rsqrt(var + EPS)
        # NOTE: rows past R in a partial last row tile hold uninitialized
        # padding; their (garbage) LN result is masked at the output store,
        # so this is benign — do not "fix" it with extra masking.
        y = (x - mean) * inv * g_ref[...] + b_ref[...]
        y_ref[...] = y.astype(y_ref.dtype)

    # fn: Linear(dim -> hidden). Matmul in the weight's native dtype (bf16 on
    # real models) with an f32 MXU accumulator.
    out = jnp.dot(y_ref[...], w_ref[...],
                  preferred_element_type=jnp.float32) + wb_ref[...]
    o_ref[...] = out.astype(o_ref.dtype)


def prepare_pernorm_params(gamma, beta, w, wb):
    """One-time (init-time) parameter prep — hoisted out of the hot path.

    Pads the fn weight/bias so the output feature dim is a multiple of 128
    (lane-dense, unmasked stores) and casts the small per-feature params to
    f32 once, so pernorm_forward does no per-call HBM pad/cast copies.
    """
    D, H = w.shape
    Hp = _round_up(H, 128)
    if Hp != H:
        w = jnp.pad(w, ((0, 0), (0, Hp - H)))
        wb = jnp.pad(wb.reshape(1, H), ((0, 0), (0, Hp - H)))
    gamma_f = gamma.reshape(1, D).astype(jnp.float32)
    beta_f = beta.reshape(1, D).astype(jnp.float32)
    wb_f = wb.reshape(1, Hp).astype(jnp.float32)
    return gamma_f, beta_f, w, wb_f, H


@functools.partial(jax.jit,
                   static_argnames=("out_features", "tile_rows", "tile_cols"))
def pernorm_forward(x, gamma_f, beta_f, w, wb_f, *,
                    out_features=None, tile_rows=None, tile_cols=512):
    B, N, D = x.shape
    Dw, Hp = w.shape
    assert Dw == D
    assert Hp % 128 == 0, "run prepare_pernorm_params() once at init"
    H = Hp if out_features is None else out_features
    R = B * N
    x2 = x.reshape(R, D)

    default_tr, vmem_cap, n_cores = _chip_profile()
    tr = default_tr if tile_rows is None else tile_rows
    # Clamp to the row count; keep a bf16 sublane pack (16 rows) alignment.
    tr = max(16, min(_round_up(tr, 16), _round_up(R, 16)))
    tn = min(tile_cols, Hp)

    # v7x: make sure both TensorCores get row-tile work on the parallel axis.
    while n_cores > 1 and pl.cdiv(R, tr) < n_cores and tr > 16:
        tr = max(16, _round_up(tr // 2, 16))

    x_isz = jnp.dtype(x.dtype).itemsize
    w_isz = jnp.dtype(w.dtype).itemsize
    o_isz = jnp.dtype(x.dtype).itemsize

    def vmem_bytes(tr_, tn_):
        return (2 * tr_ * D * x_isz          # x tile double buffer
                + 2 * tr_ * tn_ * o_isz      # output tile double buffer
                + 2 * D * tn_ * w_isz        # weight tile double buffer
                + 2 * (2 * D + tn_) * 4      # gamma / beta / bias buffers
                + tr_ * D * w_isz            # LN-result cache scratch
                + 3 * tr_ * D * 4)           # in-kernel f32 LN temporaries

    # Shrink the row tile until the estimated footprint fits the scoped cap.
    while vmem_bytes(tr, tn) > vmem_cap and tr > 16:
        tr = max(16, _round_up(tr // 2, 16))

    vmem_limit = int(min(vmem_cap,
                         max(32 * 1024 * 1024, 2 * vmem_bytes(tr, tn))))

    grid = (pl.cdiv(R, tr), pl.cdiv(Hp, tn))

    out2 = pl.pallas_call(
        pernorm_kernel,
        out_shape=jax.ShapeDtypeStruct((R, Hp), x.dtype),
        grid=grid,
        in_specs=[
            pl.BlockSpec((tr, D), lambda i, j: (i, 0)),   # x rows
            pl.BlockSpec((1, D), lambda i, j: (0, 0)),    # gamma (constant)
            pl.BlockSpec((1, D), lambda i, j: (0, 0)),    # beta  (constant)
            pl.BlockSpec((D, tn), lambda i, j: (0, j)),   # fn weight, H-tiled
            pl.BlockSpec((1, tn), lambda i, j: (0, j)),   # fn bias, H-tiled
        ],
        out_specs=pl.BlockSpec((tr, tn), lambda i, j: (i, j)),
        scratch_shapes=[pltpu.VMEM((tr, D), w.dtype)],    # LN-result cache
        compiler_params=pltpu.CompilerParams(
            dimension_semantics=("parallel", "arbitrary"),
            vmem_limit_bytes=vmem_limit),
    )(x2, gamma_f, beta_f, w, wb_f)

    if H != Hp:
        # Only taken for non-128-aligned H; prefer consuming the padded output.
        out2 = out2[:, :H]
    return out2.reshape(B, N, H)


def reference_forward(x, gamma, beta, w, wb):
    xf = x.astype(jnp.float32)
    mean = jnp.mean(xf, axis=-1, keepdims=True)
    var = jnp.mean((xf - mean) ** 2, axis=-1, keepdims=True)
    xn = (xf - mean) * jax.lax.rsqrt(var + EPS)
    y = xn * gamma.reshape(1, 1, -1).astype(jnp.float32) \
        + beta.reshape(1, 1, -1).astype(jnp.float32)
    out = jnp.dot(y.astype(w.dtype), w, preferred_element_type=jnp.float32) \
        + wb.reshape(1, 1, -1).astype(jnp.float32)
    return out.astype(x.dtype)


if __name__ == "__main__":
    key = jax.random.PRNGKey(0)
    # batch, seq (tokens), dim, hidden of fn — small but MXU/lane-aligned.
    B, N, D, H = 4, 128, 128, 256

    kx, kw, kb = jax.random.split(key, 3)
    x = jax.random.normal(kx, (B, N, D), dtype=jnp.float32).astype(jnp.bfloat16)

    # LayerNorm params: PyTorch default init (weight=1, bias=0), kept f32.
    gamma = jnp.ones((D,), dtype=jnp.float32)
    beta = jnp.zeros((D,), dtype=jnp.float32)

    # fn = Linear(D, H): bf16 weights (MXU-native), deterministic synthetic init.
    w = (jax.random.normal(kw, (D, H), dtype=jnp.float32) * 0.02).astype(jnp.bfloat16)
    wb = (jax.random.normal(kb, (1, H), dtype=jnp.float32) * 0.02).astype(jnp.bfloat16)

    # One-time init-path prep (pad to lane-dense H, cast small params to f32).
    gamma_f, beta_f, w_p, wb_f, out_features = prepare_pernorm_params(
        gamma, beta, w, wb)

    out = pernorm_forward(x, gamma_f, beta_f, w_p, wb_f,
                          out_features=out_features)
    out = jax.block_until_ready(out)

    ref = reference_forward(x, gamma, beta, w, wb)
    assert out.shape == (B, N, H)
    assert jnp.allclose(out.astype(jnp.float32), ref.astype(jnp.float32),
                        atol=2e-2, rtol=2e-2)
    print("KERNEL_OK")
</pallas_src>

<mosaic_0001>
module attributes {stable_mosaic.version = 11 : i64} {
  func.func @pernorm_kernel(%arg0: i32, %arg1: i32, %arg2: memref<256x128xbf16, #tpu.memory_space<vmem>>, %arg3: memref<1x128xf32, #tpu.memory_space<vmem>>, %arg4: memref<1x128xf32, #tpu.memory_space<vmem>>, %arg5: memref<128x256xbf16, #tpu.memory_space<vmem>>, %arg6: memref<1x256xf32, #tpu.memory_space<vmem>>, %arg7: memref<256x256xbf16, #tpu.memory_space<vmem>>, %arg8: memref<256x128xbf16, #tpu.memory_space<vmem>>) attributes {dimension_semantics = [#tpu.dimension_semantics<parallel>, #tpu.dimension_semantics<arbitrary>], iteration_bounds = array<i64: 2, 1>, scalar_prefetch = 0 : i64, scratch_operands = 1 : i64, tpu.core_type = #tpu.core_type<tc>, window_params = [{transform_indices = @transform_0, window_bounds = array<i64: 256, 128>}, {pipeline_mode = #tpu.pipeline_mode<synchronous>, transform_indices = @transform_1, window_bounds = array<i64: 1, 128>}, {pipeline_mode = #tpu.pipeline_mode<synchronous>, transform_indices = @transform_2, window_bounds = array<i64: 1, 128>}, {transform_indices = @transform_3, window_bounds = array<i64: 128, 256>}, {transform_indices = @transform_4, window_bounds = array<i64: 1, 256>}, {transform_indices = @transform_5, window_bounds = array<i64: 256, 256>}]} {
    %c0_i32 = arith.constant 0 : i32
    %0 = arith.cmpi eq, %arg1, %c0_i32 : i32
    %1 = arith.extui %0 : i1 to i32
    %c0_i32_0 = arith.constant 0 : i32
    %2 = arith.cmpi ne, %1, %c0_i32_0 : i32
    scf.if %2 {
      %c0_8 = arith.constant 0 : index
      %c0_9 = arith.constant 0 : index
      %11 = vector.load %arg2[%c0_8, %c0_9] : memref<256x128xbf16, #tpu.memory_space<vmem>>, vector<256x128xbf16>
      %12 = arith.extf %11 : vector<256x128xbf16> to vector<256x128xf32>
      %cst_10 = arith.constant dense<0.000000e+00> : vector<256xf32>
      %13 = vector.multi_reduction <add>, %12, %cst_10 [1] : vector<256x128xf32> to vector<256xf32>
      %14 = vector.shape_cast %13 : vector<256xf32> to vector<256x1xf32>
      %cst_11 = arith.constant 1.280000e+02 : f32
      %15 = vector.broadcast %cst_11 : f32 to vector<256x1xf32>
      %16 = arith.divf %14, %15 : vector<256x1xf32>
      %17 = arith.mulf %12, %12 : vector<256x128xf32>
      %cst_12 = arith.constant dense<0.000000e+00> : vector<256xf32>
      %18 = vector.multi_reduction <add>, %17, %cst_12 [1] : vector<256x128xf32> to vector<256xf32>
      %19 = vector.shape_cast %18 : vector<256xf32> to vector<256x1xf32>
      %cst_13 = arith.constant 1.280000e+02 : f32
      %20 = vector.broadcast %cst_13 : f32 to vector<256x1xf32>
      %21 = arith.divf %19, %20 : vector<256x1xf32>
      %22 = arith.mulf %16, %16 : vector<256x1xf32>
      %23 = arith.subf %21, %22 : vector<256x1xf32>
      %cst_14 = arith.constant 0.000000e+00 : f32
      %24 = vector.broadcast %cst_14 : f32 to vector<256x1xf32>
      %25 = arith.maximumf %23, %24 : vector<256x1xf32>
      %cst_15 = arith.constant 9.99999974E-6 : f32
      %26 = vector.broadcast %cst_15 : f32 to vector<256x1xf32>
      %27 = arith.addf %25, %26 : vector<256x1xf32>
      %28 = math.rsqrt %27 : vector<256x1xf32>
      %29 = vector.broadcast %16 : vector<256x1xf32> to vector<256x128xf32>
      %30 = arith.subf %12, %29 : vector<256x128xf32>
      %31 = vector.broadcast %28 : vector<256x1xf32> to vector<256x128xf32>
      %32 = arith.mulf %30, %31 : vector<256x128xf32>
      %c0_16 = arith.constant 0 : index
      %c0_17 = arith.constant 0 : index
      %33 = vector.load %arg3[%c0_16, %c0_17] : memref<1x128xf32, #tpu.memory_space<vmem>>, vector<1x128xf32>
      %34 = vector.broadcast %33 : vector<1x128xf32> to vector<256x128xf32>
      %35 = arith.mulf %32, %34 : vector<256x128xf32>
      %c0_18 = arith.constant 0 : index
      %c0_19 = arith.constant 0 : index
      %36 = vector.load %arg4[%c0_18, %c0_19] : memref<1x128xf32, #tpu.memory_space<vmem>>, vector<1x128xf32>
      %37 = vector.broadcast %36 : vector<1x128xf32> to vector<256x128xf32>
      %38 = arith.addf %35, %37 : vector<256x128xf32>
      %39 = arith.truncf %38 : vector<256x128xf32> to vector<256x128xbf16>
      %c0_20 = arith.constant 0 : index
      %c0_21 = arith.constant 0 : index
      %40 = vector.load %arg8[%c0_20, %c0_21] : memref<256x128xbf16, #tpu.memory_space<vmem>>, vector<256x128xbf16>
      tpu.vector_store %arg8[%c0_20, %c0_21], %39 {strides = array<i32>} : memref<256x128xbf16, #tpu.memory_space<vmem>>, vector<256x128xbf16>,
    } else {
    }
    %c0 = arith.constant 0 : index
    %c0_1 = arith.constant 0 : index
    %3 = vector.load %arg8[%c0, %c0_1] : memref<256x128xbf16, #tpu.memory_space<vmem>>, vector<256x128xbf16>
    %c0_2 = arith.constant 0 : index
    %c0_3 = arith.constant 0 : index
    %4 = vector.load %arg5[%c0_2, %c0_3] : memref<128x256xbf16, #tpu.memory_space<vmem>>, vector<128x256xbf16>
    %cst = arith.constant dense<0.000000e+00> : vector<256x256xf32>
    %5 = tpu.matmul %3, %4, %cst {dimension_numbers = #tpu.dot_dimension_numbers<[1], [0], [0], [1], [0, 0, 1, 1], [], []>} : vector<256x128xbf16>, vector<128x256xbf16>, vector<256x256xf32> -> vector<256x256xf32>
    %c0_4 = arith.constant 0 : index
    %c0_5 = arith.constant 0 : index
    %6 = vector.load %arg6[%c0_4, %c0_5] : memref<1x256xf32, #tpu.memory_space<vmem>>, vector<1x256xf32>
    %7 = vector.broadcast %6 : vector<1x256xf32> to vector<256x256xf32>
    %8 = arith.addf %5, %7 : vector<256x256xf32>
    %9 = arith.truncf %8 : vector<256x256xf32> to vector<256x256xbf16>
    %c0_6 = arith.constant 0 : index
    %c0_7 = arith.constant 0 : index
    %10 = vector.load %arg7[%c0_6, %c0_7] : memref<256x256xbf16, #tpu.memory_space<vmem>>, vector<256x256xbf16>
    tpu.vector_store %arg7[%c0_6, %c0_7], %9 {strides = array<i32>} : memref<256x256xbf16, #tpu.memory_space<vmem>>, vector<256x256xbf16>,
    return
  }
  func.func @transform_0(%arg0: i32, %arg1: i32) -> (i32, i32) {
    %c0_i32 = arith.constant 0 : i32
    %c0_i32_0 = arith.constant 0 : i32
    return %arg0, %c0_i32 : i32, i32
  }
  func.func @transform_1(%arg0: i32, %arg1: i32) -> (i32, i32) {
    %c0_i32 = arith.constant 0 : i32
    %c0_i32_0 = arith.constant 0 : i32
    %c0_i32_1 = arith.constant 0 : i32
    return %c0_i32, %c0_i32_0 : i32, i32
  }
  func.func @transform_2(%arg0: i32, %arg1: i32) -> (i32, i32) {
    %c0_i32 = arith.constant 0 : i32
    %c0_i32_0 = arith.constant 0 : i32
    %c0_i32_1 = arith.constant 0 : i32
    return %c0_i32, %c0_i32_0 : i32, i32
  }
  func.func @transform_3(%arg0: i32, %arg1: i32) -> (i32, i32) {
    %c0_i32 = arith.constant 0 : i32
    %c0_i32_0 = arith.constant 0 : i32
    return %c0_i32, %arg1 : i32, i32
  }
  func.func @transform_4(%arg0: i32, %arg1: i32) -> (i32, i32) {
    %c0_i32 = arith.constant 0 : i32
    %c0_i32_0 = arith.constant 0 : i32
    return %c0_i32, %arg1 : i32, i32
  }
  func.func @transform_5(%arg0: i32, %arg1: i32) -> (i32, i32) {
    %c0_i32 = arith.constant 0 : i32
    return %arg0, %arg1 : i32, i32
  }
}

</mosaic_0001>

<llo_original>
// kernel: pernorm_forward.1
$region0: #{pernorm_forward.1}
  #allocation0 [shape = 'u32[]', space=smem, size = 0x4, offset = 0x4, fixed_abs, tag = 'smem constant byte address 0x4 - core index']
  #allocation1 [shape = 'u32[144,128]{1,0:T(1,128)}', space=vmem, size = 0x12000, scoped, tag = 'internal scratch']
  #allocation2 [shape = 'bf16[256,128]{1,0:T(16,128)(2,1)}', space=vmem, size = 0x10000, scoped, tag = 'scratch operand']
  %s0 = inlined_call_operand.hbm [shape: bf16[512,128], index: 0, kind: input, shape index: {}]
  %s1 = inlined_call_operand.vmem [shape: f32[1,128], index: 1, kind: input, shape index: {}]
  %s2 = inlined_call_operand.vmem [shape: f32[1,128], index: 2, kind: input, shape index: {}]
  %s3 = inlined_call_operand.hbm [shape: bf16[128,256], index: 3, kind: input, shape index: {}]
  %s4 = inlined_call_operand.vmem [shape: f32[1,256], index: 4, kind: input, shape index: {}]
  %s5 = inlined_call_operand.hbm [shape: bf16[512,256], index: 5, kind: output, shape index: {}]
  %s6 = sld [smem:[#allocation0]]
  $region65: #{pernorm_forward.1} parent=0
    _
  %s8 = ssub.s32 1, %s6
  %s9 = scalar_select 0, %s8, %s6
  $region1: #{pernorm_forward.1} parent=0
    #allocation3 [shape = 'u8[131072]{0}', space=vmem, size = 0x20000, scoped, tag = 'input window, operand 0']
    #allocation4 [shape = 's32[2]{0}', space=sflag, size = 0x8, scoped, tag = 'scoped memory for pernorm_forward.1']
    #allocation5 [shape = 's32[2]{0}', space=sflag, size = 0x8, scoped, tag = 'scoped memory for pernorm_forward.1']
    #allocation6 [shape = 'u8[65536]{0}', space=vmem, size = 0x10000, scoped, tag = 'input window, operand 3, single buffered']
    #allocation7 [shape = 's32[1]{0}', space=sflag, size = 0x4, scoped, tag = 'scoped memory for pernorm_forward.1']
    #allocation8 [shape = 'u8[262144]{0}', space=vmem, size = 0x40000, scoped, tag = 'output window, operand 0']
    %10 = vsyncpa [#allocation4], 0
    %s11 = scalar_lea.sflag [#allocation4], 1
    %12 = vsyncpa %s11, 0
    %13 = vsyncpa [#allocation7], 0
    %14 = vsyncpa [#allocation5], 0
    %s15 = scalar_lea.sflag [#allocation5], 1
    %16 = vsyncpa %s15, 0
    loop: start=0, step=1, limit=4
    $region2: #{pernorm_forward.1} parent=1 // loop_pre_header
      _
    $region3: #{pernorm_forward.1} parent=1 // loop_header
      %s18 = sphi 0, %s22
      %p19 = scmp.ge.s32.totalorder %s18, 4
      %s25 = sphi 0, %s37
      %s26 = sphi 0, %s33
      %s27 = sphi 0, %s25
      %s28 = sphi 0, %s26
      %s29 = sphi 0, %s27
      %s30 = sphi 0, %s28
      %s40 = sphi 0, %s42
      %s43 = sphi 0, %s40
      %s44 = sphi 0, %s43
      %s60 = sphi 0, %s44
      %s64 = sphi 0, %s64
      %s66 = sphi 0, %s64
      %s67 = sphi 0, %s66
      %s81 = sphi 0, %s67
      %s85 = sphi 0, %s85
      %s87 = sphi 0, %s85
      %s88 = sphi 0, %s87
      %s102 = sphi 0, %s88
      %s108 = sphi 0, %s110
      %s111 = sphi 0, %s108
      %s112 = sphi 0, %s111
      %s128 = sphi 0, %s112
      %s134 = sphi 0, %s136
      %s137 = sphi 0, %s134
      %s138 = sphi 0, %s137
      %s154 = sphi 0, %s138
      %s162 = sphi 0, %s164
      %s165 = sphi 0, %s162
      %s166 = sphi 0, %s165
      %s182 = sphi 0, %s166
    $region4: #{pernorm_forward.1} parent=1 // loop_header_branch
      %21 = sbr.rel (%p19) target = $region8
    $region5: #{pernorm_forward.1} parent=1 // loop_body
      %s23 = ssub.s32 %s18, 1
      %s24 = ssub.s32 %s18, 2
      %s31 = sadd.s32 1, %s26
      %p32 = scmp.ge.s32.totalorder %s31, 1
      %s33 = scalar_select %p32, 0, %s31
      %s34 = sadd.s32 1, %s25
      %s35 = scalar_select %p32, %s34, %s25
      %p36 = scmp.ge.s32.totalorder %s35, 2
      %s37 = scalar_select %p36, 0, %s35
      %s38 = ssub.s32 %s25, %s37
      %p39 = scmp.eq.s32.totalorder %s38, 0
      %s41 = sadd.s32 %s40, 1
      %s42 = scalar_select %p39, %s40, %s41
      %p45 = pneg %p39
      %p46 = scmp.eq.s32.totalorder %s18, 1
      %p47 = por %p45, %p46
      %p48 = scmp.ne.s32.totalorder %s40, %s43
      %p49 = scmp.eq.s32.totalorder %s18, 0
      %p50 = por %p48, %p49
      %p51 = scmp.ne.s32.totalorder %s40, %s43
      %p52 = scmp.eq.s32.totalorder %s23, 1
      %p53 = por %p51, %p52
      %p54 = scmp.ne.s32.totalorder %s43, %s44
      %p55 = scmp.eq.s32.totalorder %s23, 0
      %p56 = por %p54, %p55
      %p57 = scmp.ne.s32.totalorder %s43, %s44
      %p58 = scmp.eq.s32.totalorder %s24, 1
      %p59 = por %p57, %p58
      %p61 = scmp.ne.s32.totalorder %s44, %s60
      %p62 = scmp.eq.s32.totalorder %s24, 0
      %p63 = por %p61, %p62
      %s65 = sadd.s32 %s64, 1
      %p68 = scmp.eq.s32.totalorder %s18, 1
      %p69 = scmp.ne.s32.totalorder %s64, %s66
      %p70 = scmp.eq.s32.totalorder %s18, 0
      %p71 = por %p69, %p70
      %p72 = scmp.ne.s32.totalorder %s64, %s66
      %p73 = scmp.eq.s32.totalorder %s23, 1
      %p74 = por %p72, %p73
      %p75 = scmp.ne.s32.totalorder %s66, %s67
      %p76 = scmp.eq.s32.totalorder %s23, 0
      %p77 = por %p75, %p76
      %p78 = scmp.ne.s32.totalorder %s66, %s67
      %p79 = scmp.eq.s32.totalorder %s24, 1
      %p80 = por %p78, %p79
      %p82 = scmp.ne.s32.totalorder %s67, %s81
      %p83 = scmp.eq.s32.totalorder %s24, 0
      %p84 = por %p82, %p83
      %s86 = sadd.s32 %s85, 1
      %p89 = scmp.eq.s32.totalorder %s18, 1
      %p90 = scmp.ne.s32.totalorder %s85, %s87
      %p91 = scmp.eq.s32.totalorder %s18, 0
      %p92 = por %p90, %p91
      %p93 = scmp.ne.s32.totalorder %s85, %s87
      %p94 = scmp.eq.s32.totalorder %s23, 1
      %p95 = por %p93, %p94
      %p96 = scmp.ne.s32.totalorder %s87, %s88
      %p97 = scmp.eq.s32.totalorder %s23, 0
      %p98 = por %p96, %p97
      %p99 = scmp.ne.s32.totalorder %s87, %s88
      %p100 = scmp.eq.s32.totalorder %s24, 1
      %p101 = por %p99, %p100
      %p103 = scmp.ne.s32.totalorder %s88, %s102
      %p104 = scmp.eq.s32.totalorder %s24, 0
      %p105 = por %p103, %p104
      %s106 = ssub.s32 %s26, %s33
      %p107 = scmp.eq.s32.totalorder %s106, 0
      %s109 = sadd.s32 %s108, 1
      %s110 = scalar_select %p107, %s108, %s109
      %p113 = pneg %p107
      %p114 = scmp.eq.s32.totalorder %s18, 1
      %p115 = por %p113, %p114
      %p116 = scmp.ne.s32.totalorder %s108, %s111
      %p117 = scmp.eq.s32.totalorder %s18, 0
      %p118 = por %p116, %p117
      %p119 = scmp.ne.s32.totalorder %s108, %s111
      %p120 = scmp.eq.s32.totalorder %s23, 1
      %p121 = por %p119, %p120
      %p122 = scmp.ne.s32.totalorder %s111, %s112
      %p123 = scmp.eq.s32.totalorder %s23, 0
      %p124 = por %p122, %p123
      %p125 = scmp.ne.s32.totalorder %s111, %s112
      %p126 = scmp.eq.s32.totalorder %s24, 1
      %p127 = por %p125, %p126
      %p129 = scmp.ne.s32.totalorder %s112, %s128
      %p130 = scmp.eq.s32.totalorder %s24, 0
      %p131 = por %p129, %p130
      %s132 = ssub.s32 %s26, %s33
      %p133 = scmp.eq.s32.totalorder %s132, 0
      %s135 = sadd.s32 %s134, 1
      %s136 = scalar_select %p133, %s134, %s135
      %p139 = pneg %p133
      %p140 = scmp.eq.s32.totalorder %s18, 1
      %p141 = por %p139, %p140
      %p142 = scmp.ne.s32.totalorder %s134, %s137
      %p143 = scmp.eq.s32.totalorder %s18, 0
      %p144 = por %p142, %p143
      %p145 = scmp.ne.s32.totalorder %s134, %s137
      %p146 = scmp.eq.s32.totalorder %s23, 1
      %p147 = por %p145, %p146
      %p148 = scmp.ne.s32.totalorder %s137, %s138
      %p149 = scmp.eq.s32.totalorder %s23, 0
      %p150 = por %p148, %p149
      %p151 = scmp.ne.s32.totalorder %s137, %s138
      %p152 = scmp.eq.s32.totalorder %s24, 1
      %p153 = por %p151, %p152
      %p155 = scmp.ne.s32.totalorder %s138, %s154
      %p156 = scmp.eq.s32.totalorder %s24, 0
      %p157 = por %p155, %p156
      %s158 = ssub.s32 %s25, %s37
      %s159 = ssub.s32 %s26, %s33
      %s160 = sor.u32 %s158, %s159
      %p161 = scmp.eq.s32.totalorder %s160, 0
      %s163 = sadd.s32 %s162, 1
      %s164 = scalar_select %p161, %s162, %s163
      %p167 = pneg %p161
      %p168 = scmp.eq.s32.totalorder %s18, 1
      %p169 = por %p167, %p168
      %p170 = scmp.ne.s32.totalorder %s162, %s165
      %p171 = scmp.eq.s32.totalorder %s18, 0
      %p172 = por %p170, %p171
      %p173 = scmp.ne.s32.totalorder %s162, %s165
      %p174 = scmp.eq.s32.totalorder %s23, 1
      %p175 = por %p173, %p174
      %p176 = scmp.ne.s32.totalorder %s165, %s166
      %p177 = scmp.eq.s32.totalorder %s23, 0
      %p178 = por %p176, %p177
      %p179 = scmp.ne.s32.totalorder %s165, %s166
      %p180 = scmp.eq.s32.totalorder %s24, 1
      %p181 = por %p179, %p180
      %p183 = scmp.ne.s32.totalorder %s166, %s182
      %p184 = scmp.eq.s32.totalorder %s24, 0
      %p185 = por %p183, %p184
      %p186 = scmp.le.s32.totalorder 1, %s18
      %p187 = scmp.lt.s32.totalorder %s18, 3
      %p188 = pnand %p186, %p187
      %p189 = pneg %p188
      // Predicated region
      $region9: #{pernorm_forward.1} parent=5 // pred_check
        _
      $region10: #{pernorm_forward.1} parent=5 // pred_check_branch
        %191 = sbr.rel (%p188) target = $region12
      $region11: #{pernorm_forward.1} parent=5 // pred_region
        %s192 = ssub.s32 %s18, 1
        // Predicated region
        $region13: #{pernorm_forward.1} parent=11 // pred_check
          %p193 = pneg %p77
        $region14: #{pernorm_forward.1} parent=11 // pred_check_branch
          %195 = sbr.rel (%p193) target = $region16
        $region15: #{pernorm_forward.1} parent=11 // pred_region
          _
        $region16: #{pernorm_forward.1} parent=11 // pred_fallthru
          _
        // Predicated region
        $region17: #{pernorm_forward.1} parent=11 // pred_check
          %p196 = pneg %p98
        $region18: #{pernorm_forward.1} parent=11 // pred_check_branch
          %198 = sbr.rel (%p196) target = $region20
        $region19: #{pernorm_forward.1} parent=11 // pred_region
          _
        $region20: #{pernorm_forward.1} parent=11 // pred_fallthru
          _
        // Predicated region
        $region21: #{pernorm_forward.1} parent=11 // pred_check
          %p199 = pneg %p124
        $region22: #{pernorm_forward.1} parent=11 // pred_check_branch
          %201 = sbr.rel (%p199) target = $region24
        $region23: #{pernorm_forward.1} parent=11 // pred_region
          %s202 = smul.u32 2, %s28
          %s204 = ssub.s32 2048, 2048
          %205 = vsyncadd [#allocation7], %s204
          %s206 = smul.addr %s202, 64
          %s207 = scalar_lea.hbm %s3, %s206
          %s208 = sshll.u32 [#allocation6], 4
          %s209 = int_to_ptr.vmem [resolvable:$true] %s208
          %214 = dma.hbm_to_vmem [thread:$0]  %s207, 2048, %s209, [#allocation7], 128, 128, 8
        $region24: #{pernorm_forward.1} parent=11 // pred_fallthru
          _
        // Predicated region
        $region25: #{pernorm_forward.1} parent=11 // pred_check
          %p215 = pneg %p150
        $region26: #{pernorm_forward.1} parent=11 // pred_check_branch
          %217 = sbr.rel (%p215) target = $region28
        $region27: #{pernorm_forward.1} parent=11 // pred_region
          %s218 = smul.u32 2, %s28
          %p219 = scmp.lt.s32.totalorder %s218, 1
          %s220 = scalar_select %p219, %s218, 1
          %s221 = scalar_lea.vmem %s4, %s220
          %s222 = smul.u32 2, %s28
        $region28: #{pernorm_forward.1} parent=11 // pred_fallthru
          _
      $region12: #{pernorm_forward.1} parent=5 // pred_fallthru
        _
      %p223 = scmp.lt.s32.totalorder %s18, 2
      // Predicated region
      $region29: #{pernorm_forward.1} parent=5 // pred_check
        %p224 = pneg %p223
      $region30: #{pernorm_forward.1} parent=5 // pred_check_branch
        %226 = sbr.rel (%p224) target = $region32
      $region31: #{pernorm_forward.1} parent=5 // pred_region
        // Predicated region
        $region33: #{pernorm_forward.1} parent=31 // pred_check
          %p227 = pneg %p50
        $region34: #{pernorm_forward.1} parent=31 // pred_check_branch
          %229 = sbr.rel (%p227) target = $region36
        $region35: #{pernorm_forward.1} parent=31 // pred_region
          %s230 = sand.u32 %s40, 1
          %s231 = scalar_lea.sflag [#allocation4], %s230
          %s232 = sand.u32 %s40, 1
          %s233 = smul.addr %s232, 128
          %s234 = scalar_lea.vmem [#allocation3], %s233
          %s235 = smul.u32 32, %s25
          %s237 = ssub.s32 2048, 2048
          %238 = vsyncadd %s231, %s237
          %s239 = smul.addr %s235, 64
          %s240 = scalar_lea.hbm %s0, %s239
          %s241 = sshll.u32 %s234, 4
          %s242 = int_to_ptr.vmem [resolvable:$true] %s241
          %247 = dma.hbm_to_vmem [thread:$0]  %s240, 2048, %s242, %s231, 64, 64, 4
        $region36: #{pernorm_forward.1} parent=31 // pred_fallthru
          _
      $region32: #{pernorm_forward.1} parent=5 // pred_fallthru
        _
      %p248 = scmp.le.s32.totalorder 1, %s18
      %p249 = scmp.lt.s32.totalorder %s18, 3
      %p250 = pnand %p248, %p249
      %p251 = pneg %p250
      // Predicated region
      $region37: #{pernorm_forward.1} parent=5 // pred_check
        _
      $region38: #{pernorm_forward.1} parent=5 // pred_check_branch
        %253 = sbr.rel (%p250) target = $region40
      $region39: #{pernorm_forward.1} parent=5 // pred_region
        %s254 = ssub.s32 %s18, 1
        %s255 = sand.u32 %s43, 1
        %s256 = scalar_lea.sflag [#allocation4], %s255
        %s257 = sand.u32 %s43, 1
        %s258 = smul.addr %s257, 128
        %s259 = scalar_lea.vmem [#allocation3], %s258
        // Predicated region
        $region41: #{pernorm_forward.1} parent=39 // pred_check
          %p260 = pneg %p56
        $region42: #{pernorm_forward.1} parent=39 // pred_check_branch
          %262 = sbr.rel (%p260) target = $region44
        $region43: #{pernorm_forward.1} parent=39 // pred_region
          %263 = dma.done %s256, 2048
        $region44: #{pernorm_forward.1} parent=39 // pred_fallthru
          _
        // Predicated region
        $region45: #{pernorm_forward.1} parent=39 // pred_check
          %p264 = pneg %p124
        $region46: #{pernorm_forward.1} parent=39 // pred_check_branch
          %266 = sbr.rel (%p264) target = $region48
        $region47: #{pernorm_forward.1} parent=39 // pred_region
          %267 = dma.done [#allocation7], 2048
        $region48: #{pernorm_forward.1} parent=39 // pred_fallthru
          _
        %s268 = sand.u32 %s43, 1
        %s269 = scalar_lea.sflag [#allocation4], %s268
        %s270 = sand.u32 %s43, 1
        %s271 = smul.addr %s270, 128
        %s272 = scalar_lea.vmem [#allocation3], %s271
        %p273 = pneg %p56
        %p274 = pneg %p53
        %p275 = pneg %p77
        %p276 = pneg %p74
        %p277 = pneg %p98
        %p278 = pneg %p95
        %p279 = pneg %p124
        %p280 = pneg %p121
        %s281 = smul.u32 2, %s28
        %p282 = scmp.lt.s32.totalorder %s281, 1
        %s283 = scalar_select %p282, %s281, 1
        %s284 = scalar_lea.vmem %s4, %s283
        %p285 = pneg %p150
        %p286 = pneg %p147
        %p287 = pneg %p178
        %p288 = pneg %p175
        %s289 = sand.u32 %s165, 1
        %s290 = scalar_lea.sflag [#allocation5], %s289
        %s291 = sand.u32 %s165, 1
        %s292 = smul.addr %s291, 256
        %s293 = scalar_lea.vmem [#allocation8], %s292
        %s294 = smul.u32 32, %s27
        %s295 = smul.u32 2, %s28
        %s296 = smul.u32 2, %s28
        %p297 = scmp.lt.s32.totalorder %s296, 1
        %s298 = scalar_select %p297, %s296, 1
        %s299 = scalar_lea.vmem %s4, %s298
        %s300 = smul.u32 2, %s28
        %s301 = smul.u32 32, %s27
        %s302 = smul.u32 2, %s28
        %p304 = scmp.eq.s32.totalorder %s28, 0
        // Predicated region
        $region49: #{pernorm_forward.1} parent=39 // pred_check
          %p305 = pneg %p304
        $region50: #{pernorm_forward.1} parent=39 // pred_check_branch
          %307 = sbr.rel (%p305) target = $region52
        $region51: #{pernorm_forward.1} parent=39 // pred_region
          %v308 = vld [vmem:[%s259] sm:$0xf]
          %v309 = vld [vmem:[%s259 + $0x4] sm:$0xf]
          %v310 = vld [vmem:[%s259 + $0x8] sm:$0xf]
          %v311 = vld [vmem:[%s259 + $0xc] sm:$0xf]
          %v312 = vld [vmem:[%s259 + $0x10] sm:$0xf]
          %v313 = vld [vmem:[%s259 + $0x14] sm:$0xf]
          %v314 = vld [vmem:[%s259 + $0x18] sm:$0xf]
          %v315 = vld [vmem:[%s259 + $0x1c] sm:$0xf]
          %v316 = vld [vmem:[%s259 + $0x20] sm:$0xf]
          %v317 = vld [vmem:[%s259 + $0x24] sm:$0xf]
          %v318 = vld [vmem:[%s259 + $0x28] sm:$0xf]
          %v319 = vld [vmem:[%s259 + $0x2c] sm:$0xf]
          %v320 = vld [vmem:[%s259 + $0x30] sm:$0xf]
          %v321 = vld [vmem:[%s259 + $0x34] sm:$0xf]
          %v322 = vld [vmem:[%s259 + $0x38] sm:$0xf]
          %v323 = vld [vmem:[%s259 + $0x3c] sm:$0xf]
          %v324 = vld [vmem:[%s259 + $0x40] sm:$0xf]
          %v325 = vld [vmem:[%s259 + $0x44] sm:$0xf]
          %v326 = vld [vmem:[%s259 + $0x48] sm:$0xf]
          %v327 = vld [vmem:[%s259 + $0x4c] sm:$0xf]
          %v328 = vld [vmem:[%s259 + $0x50] sm:$0xf]
          %v329 = vld [vmem:[%s259 + $0x54] sm:$0xf]
          %v330 = vld [vmem:[%s259 + $0x58] sm:$0xf]
          %v331 = vld [vmem:[%s259 + $0x5c] sm:$0xf]
          %v332 = vld [vmem:[%s259 + $0x60] sm:$0xf]
          %v333 = vld [vmem:[%s259 + $0x64] sm:$0xf]
          %v334 = vld [vmem:[%s259 + $0x68] sm:$0xf]
          %v335 = vld [vmem:[%s259 + $0x6c] sm:$0xf]
          %v336 = vld [vmem:[%s259 + $0x70] sm:$0xf]
          %v337 = vld [vmem:[%s259 + $0x74] sm:$0xf]
          %v338 = vld [vmem:[%s259 + $0x78] sm:$0xf]
          %v339 = vld [vmem:[%s259 + $0x7c] sm:$0xf]
          %v340 = vunpack.c.l.bf16 %v308
          %v341 = vunpack.c.l.bf16 %v309
          %v342 = vunpack.c.l.bf16 %v310
          %v343 = vunpack.c.l.bf16 %v311
          %v344 = vunpack.c.l.bf16 %v312
          %v345 = vunpack.c.l.bf16 %v313
          %v346 = vunpack.c.l.bf16 %v314
          %v347 = vunpack.c.l.bf16 %v315
          %v348 = vunpack.c.l.bf16 %v316
          %v349 = vunpack.c.l.bf16 %v317
          %v350 = vunpack.c.l.bf16 %v318
          %v351 = vunpack.c.l.bf16 %v319
          %v352 = vunpack.c.l.bf16 %v320
          %v353 = vunpack.c.l.bf16 %v321
          %v354 = vunpack.c.l.bf16 %v322
          %v355 = vunpack.c.l.bf16 %v323
          %v356 = vunpack.c.l.bf16 %v324
          %v357 = vunpack.c.l.bf16 %v325
          %v358 = vunpack.c.l.bf16 %v326
          %v359 = vunpack.c.l.bf16 %v327
          %v360 = vunpack.c.l.bf16 %v328
          %v361 = vunpack.c.l.bf16 %v329
          %v362 = vunpack.c.l.bf16 %v330
          %v363 = vunpack.c.l.bf16 %v331
          %v364 = vunpack.c.l.bf16 %v332
          %v365 = vunpack.c.l.bf16 %v333
          %v366 = vunpack.c.l.bf16 %v334
          %v367 = vunpack.c.l.bf16 %v335
          %v368 = vunpack.c.l.bf16 %v336
          %v369 = vunpack.c.l.bf16 %v337
          %v370 = vunpack.c.l.bf16 %v338
          %v371 = vunpack.c.l.bf16 %v339
          %372 = vadd.xlane.f32.xlu0 %v340
          %v373 = vpop.xlane.xlu0 %372
          %374 = vadd.xlane.f32.xlu0 %v341
          %v375 = vpop.xlane.xlu0 %374
          %376 = vadd.xlane.f32.xlu0 %v342
          %v377 = vpop.xlane.xlu0 %376
          %378 = vadd.xlane.f32.xlu0 %v343
          %v379 = vpop.xlane.xlu0 %378
          %380 = vadd.xlane.f32.xlu0 %v344
          %v381 = vpop.xlane.xlu0 %380
          %382 = vadd.xlane.f32.xlu0 %v345
          %v383 = vpop.xlane.xlu0 %382
          %384 = vadd.xlane.f32.xlu0 %v346
          %v385 = vpop.xlane.xlu0 %384
          %386 = vadd.xlane.f32.xlu0 %v347
          %v387 = vpop.xlane.xlu0 %386
          %388 = vadd.xlane.f32.xlu0 %v348
          %v389 = vpop.xlane.xlu0 %388
          %390 = vadd.xlane.f32.xlu0 %v349
          %v391 = vpop.xlane.xlu0 %390
          %392 = vadd.xlane.f32.xlu0 %v350
          %v393 = vpop.xlane.xlu0 %392
          %394 = vadd.xlane.f32.xlu0 %v351
          %v395 = vpop.xlane.xlu0 %394
          %396 = vadd.xlane.f32.xlu0 %v352
          %v397 = vpop.xlane.xlu0 %396
          %398 = vadd.xlane.f32.xlu0 %v353
          %v399 = vpop.xlane.xlu0 %398
          %400 = vadd.xlane.f32.xlu0 %v354
          %v401 = vpop.xlane.xlu0 %400
          %402 = vadd.xlane.f32.xlu0 %v355
          %v403 = vpop.xlane.xlu0 %402
          %404 = vadd.xlane.f32.xlu0 %v356
          %v405 = vpop.xlane.xlu0 %404
          %406 = vadd.xlane.f32.xlu0 %v357
          %v407 = vpop.xlane.xlu0 %406
          %408 = vadd.xlane.f32.xlu0 %v358
          %v409 = vpop.xlane.xlu0 %408
          %410 = vadd.xlane.f32.xlu0 %v359
          %v411 = vpop.xlane.xlu0 %410
          %412 = vadd.xlane.f32.xlu0 %v360
          %v413 = vpop.xlane.xlu0 %412
          %414 = vadd.xlane.f32.xlu0 %v361
          %v415 = vpop.xlane.xlu0 %414
          %416 = vadd.xlane.f32.xlu0 %v362
          %v417 = vpop.xlane.xlu0 %416
          %418 = vadd.xlane.f32.xlu0 %v363
          %v419 = vpop.xlane.xlu0 %418
          %420 = vadd.xlane.f32.xlu0 %v364
          %v421 = vpop.xlane.xlu0 %420
          %422 = vadd.xlane.f32.xlu0 %v365
          %v423 = vpop.xlane.xlu0 %422
          %424 = vadd.xlane.f32.xlu0 %v366
          %v425 = vpop.xlane.xlu0 %424
          %426 = vadd.xlane.f32.xlu0 %v367
          %v427 = vpop.xlane.xlu0 %426
          %428 = vadd.xlane.f32.xlu0 %v368
          %v429 = vpop.xlane.xlu0 %428
          %430 = vadd.xlane.f32.xlu0 %v369
          %v431 = vpop.xlane.xlu0 %430
          %432 = vadd.xlane.f32.xlu0 %v370
          %v433 = vpop.xlane.xlu0 %432
          %434 = vadd.xlane.f32.xlu0 %v371
          %v435 = vpop.xlane.xlu0 %434
          %v436 = vrcp.pop 128.0
          %v437 = vmul.f32 %v373, %v436
          %v438 = vmul.f32 %v375, %v436
          %v439 = vmul.f32 %v377, %v436
          %v440 = vmul.f32 %v379, %v436
          %v441 = vmul.f32 %v381, %v436
          %v442 = vmul.f32 %v383, %v436
          %v443 = vmul.f32 %v385, %v436
          %v444 = vmul.f32 %v387, %v436
          %v445 = vmul.f32 %v389, %v436
          %v446 = vmul.f32 %v391, %v436
          %v447 = vmul.f32 %v393, %v436
          %v448 = vmul.f32 %v395, %v436
          %v449 = vmul.f32 %v397, %v436
          %v450 = vmul.f32 %v399, %v436
          %v451 = vmul.f32 %v401, %v436
          %v452 = vmul.f32 %v403, %v436
          %v453 = vmul.f32 %v405, %v436
          %v454 = vmul.f32 %v407, %v436
          %v455 = vmul.f32 %v409, %v436
          %v456 = vmul.f32 %v411, %v436
          %v457 = vmul.f32 %v413, %v436
          %v458 = vmul.f32 %v415, %v436
          %v459 = vmul.f32 %v417, %v436
          %v460 = vmul.f32 %v419, %v436
          %v461 = vmul.f32 %v421, %v436
          %v462 = vmul.f32 %v423, %v436
          %v463 = vmul.f32 %v425, %v436
          %v464 = vmul.f32 %v427, %v436
          %v465 = vmul.f32 %v429, %v436
          %v466 = vmul.f32 %v431, %v436
          %v467 = vmul.f32 %v433, %v436
          %v468 = vmul.f32 %v435, %v436
          %v469 = vmul.f32 %v340, %v340
          %v470 = vmul.f32 %v341, %v341
          %v471 = vmul.f32 %v342, %v342
          %v472 = vmul.f32 %v343, %v343
          %v473 = vmul.f32 %v344, %v344
          %v474 = vmul.f32 %v345, %v345
          %v475 = vmul.f32 %v346, %v346
          %v476 = vmul.f32 %v347, %v347
          %v477 = vmul.f32 %v348, %v348
          %v478 = vmul.f32 %v349, %v349
          %v479 = vmul.f32 %v350, %v350
          %v480 = vmul.f32 %v351, %v351
          %v481 = vmul.f32 %v352, %v352
          %v482 = vmul.f32 %v353, %v353
          %v483 = vmul.f32 %v354, %v354
          %v484 = vmul.f32 %v355, %v355
          %v485 = vmul.f32 %v356, %v356
          %v486 = vmul.f32 %v357, %v357
          %v487 = vmul.f32 %v358, %v358
          %v488 = vmul.f32 %v359, %v359
          %v489 = vmul.f32 %v360, %v360
          %v490 = vmul.f32 %v361, %v361
          %v491 = vmul.f32 %v362, %v362
          %v492 = vmul.f32 %v363, %v363
          %v493 = vmul.f32 %v364, %v364
          %v494 = vmul.f32 %v365, %v365
          %v495 = vmul.f32 %v366, %v366
          %v496 = vmul.f32 %v367, %v367
          %v497 = vmul.f32 %v368, %v368
          %v498 = vmul.f32 %v369, %v369
          %v499 = vmul.f32 %v370, %v370
          %v500 = vmul.f32 %v371, %v371
          %501 = vadd.xlane.f32.xlu0 %v469
          %v502 = vpop.xlane.xlu0 %501
          %503 = vadd.xlane.f32.xlu0 %v470
          %v504 = vpop.xlane.xlu0 %503
          %505 = vadd.xlane.f32.xlu0 %v471
          %v506 = vpop.xlane.xlu0 %505
          %507 = vadd.xlane.f32.xlu0 %v472
          %v508 = vpop.xlane.xlu0 %507
          %509 = vadd.xlane.f32.xlu0 %v473
          %v510 = vpop.xlane.xlu0 %509
          %511 = vadd.xlane.f32.xlu0 %v474
          %v512 = vpop.xlane.xlu0 %511
          %513 = vadd.xlane.f32.xlu0 %v475
          %v514 = vpop.xlane.xlu0 %513
          %515 = vadd.xlane.f32.xlu0 %v476
          %v516 = vpop.xlane.xlu0 %515
          %517 = vadd.xlane.f32.xlu0 %v477
          %v518 = vpop.xlane.xlu0 %517
          %519 = vadd.xlane.f32.xlu0 %v478
          %v520 = vpop.xlane.xlu0 %519
          %521 = vadd.xlane.f32.xlu0 %v479
          %v522 = vpop.xlane.xlu0 %521
          %523 = vadd.xlane.f32.xlu0 %v480
          %v524 = vpop.xlane.xlu0 %523
          %525 = vadd.xlane.f32.xlu0 %v481
          %v526 = vpop.xlane.xlu0 %525
          %527 = vadd.xlane.f32.xlu0 %v482
          %v528 = vpop.xlane.xlu0 %527
          %529 = vadd.xlane.f32.xlu0 %v483
          %v530 = vpop.xlane.xlu0 %529
          %531 = vadd.xlane.f32.xlu0 %v484
          %v532 = vpop.xlane.xlu0 %531
          %533 = vadd.xlane.f32.xlu0 %v485
          %v534 = vpop.xlane.xlu0 %533
          %535 = vadd.xlane.f32.xlu0 %v486
          %v536 = vpop.xlane.xlu0 %535
          %537 = vadd.xlane.f32.xlu0 %v487
          %v538 = vpop.xlane.xlu0 %537
          %539 = vadd.xlane.f32.xlu0 %v488
          %v540 = vpop.xlane.xlu0 %539
          %541 = vadd.xlane.f32.xlu0 %v489
          %v542 = vpop.xlane.xlu0 %541
          %543 = vadd.xlane.f32.xlu0 %v490
          %v544 = vpop.xlane.xlu0 %543
          %545 = vadd.xlane.f32.xlu0 %v491
          %v546 = vpop.xlane.xlu0 %545
          %547 = vadd.xlane.f32.xlu0 %v492
          %v548 = vpop.xlane.xlu0 %547
          %549 = vadd.xlane.f32.xlu0 %v493
          %v550 = vpop.xlane.xlu0 %549
          %551 = vadd.xlane.f32.xlu0 %v494
          %v552 = vpop.xlane.xlu0 %551
          %553 = vadd.xlane.f32.xlu0 %v495
          %v554 = vpop.xlane.xlu0 %553
          %555 = vadd.xlane.f32.xlu0 %v496
          %v556 = vpop.xlane.xlu0 %555
          %557 = vadd.xlane.f32.xlu0 %v497
          %v558 = vpop.xlane.xlu0 %557
          %559 = vadd.xlane.f32.xlu0 %v498
          %v560 = vpop.xlane.xlu0 %559
          %561 = vadd.xlane.f32.xlu0 %v499
          %v562 = vpop.xlane.xlu0 %561
          %563 = vadd.xlane.f32.xlu0 %v500
          %v564 = vpop.xlane.xlu0 %563
          %v565 = vmul.f32 %v502, %v436
          %v566 = vmul.f32 %v504, %v436
          %v567 = vmul.f32 %v506, %v436
          %v568 = vmul.f32 %v508, %v436
          %v569 = vmul.f32 %v510, %v436
          %v570 = vmul.f32 %v512, %v436
          %v571 = vmul.f32 %v514, %v436
          %v572 = vmul.f32 %v516, %v436
          %v573 = vmul.f32 %v518, %v436
          %v574 = vmul.f32 %v520, %v436
          %v575 = vmul.f32 %v522, %v436
          %v576 = vmul.f32 %v524, %v436
          %v577 = vmul.f32 %v526, %v436
          %v578 = vmul.f32 %v528, %v436
          %v579 = vmul.f32 %v530, %v436
          %v580 = vmul.f32 %v532, %v436
          %v581 = vmul.f32 %v534, %v436
          %v582 = vmul.f32 %v536, %v436
          %v583 = vmul.f32 %v538, %v436
          %v584 = vmul.f32 %v540, %v436
          %v585 = vmul.f32 %v542, %v436
          %v586 = vmul.f32 %v544, %v436
          %v587 = vmul.f32 %v546, %v436
          %v588 = vmul.f32 %v548, %v436
          %v589 = vmul.f32 %v550, %v436
          %v590 = vmul.f32 %v552, %v436
          %v591 = vmul.f32 %v554, %v436
          %v592 = vmul.f32 %v556, %v436
          %v593 = vmul.f32 %v558, %v436
          %v594 = vmul.f32 %v560, %v436
          %v595 = vmul.f32 %v562, %v436
          %v596 = vmul.f32 %v564, %v436
          %v597 = vmul.f32 %v437, %v437
          %v598 = vmul.f32 %v438, %v438
          %v599 = vmul.f32 %v439, %v439
          %v600 = vmul.f32 %v440, %v440
          %v601 = vmul.f32 %v441, %v441
          %v602 = vmul.f32 %v442, %v442
          %v603 = vmul.f32 %v443, %v443
          %v604 = vmul.f32 %v444, %v444
          %v605 = vmul.f32 %v445, %v445
          %v606 = vmul.f32 %v446, %v446
          %v607 = vmul.f32 %v447, %v447
          %v608 = vmul.f32 %v448, %v448
          %v609 = vmul.f32 %v449, %v449
          %v610 = vmul.f32 %v450, %v450
          %v611 = vmul.f32 %v451, %v451
          %v612 = vmul.f32 %v452, %v452
          %v613 = vmul.f32 %v453, %v453
          %v614 = vmul.f32 %v454, %v454
          %v615 = vmul.f32 %v455, %v455
          %v616 = vmul.f32 %v456, %v456
          %v617 = vmul.f32 %v457, %v457
          %v618 = vmul.f32 %v458, %v458
          %v619 = vmul.f32 %v459, %v459
          %v620 = vmul.f32 %v460, %v460
          %v621 = vmul.f32 %v461, %v461
          %v622 = vmul.f32 %v462, %v462
          %v623 = vmul.f32 %v463, %v463
          %v624 = vmul.f32 %v464, %v464
          %v625 = vmul.f32 %v465, %v465
          %v626 = vmul.f32 %v466, %v466
          %v627 = vmul.f32 %v467, %v467
          %v628 = vmul.f32 %v468, %v468
          %v629 = vsub.f32 %v565, %v597
          %v630 = vsub.f32 %v566, %v598
          %v631 = vsub.f32 %v567, %v599
          %v632 = vsub.f32 %v568, %v600
          %v633 = vsub.f32 %v569, %v601
          %v634 = vsub.f32 %v570, %v602
          %v635 = vsub.f32 %v571, %v603
          %v636 = vsub.f32 %v572, %v604
          %v637 = vsub.f32 %v573, %v605
          %v638 = vsub.f32 %v574, %v606
          %v639 = vsub.f32 %v575, %v607
          %v640 = vsub.f32 %v576, %v608
          %v641 = vsub.f32 %v577, %v609
          %v642 = vsub.f32 %v578, %v610
          %v643 = vsub.f32 %v579, %v611
          %v644 = vsub.f32 %v580, %v612
          %v645 = vsub.f32 %v581, %v613
          %v646 = vsub.f32 %v582, %v614
          %v647 = vsub.f32 %v583, %v615
          %v648 = vsub.f32 %v584, %v616
          %v649 = vsub.f32 %v585, %v617
          %v650 = vsub.f32 %v586, %v618
          %v651 = vsub.f32 %v587, %v619
          %v652 = vsub.f32 %v588, %v620
          %v653 = vsub.f32 %v589, %v621
          %v654 = vsub.f32 %v590, %v622
          %v655 = vsub.f32 %v591, %v623
          %v656 = vsub.f32 %v592, %v624
          %v657 = vsub.f32 %v593, %v625
          %v658 = vsub.f32 %v594, %v626
          %v659 = vsub.f32 %v595, %v627
          %v660 = vsub.f32 %v596, %v628
          %v661 = vmax.f32 %v629, 0.0
          %v662 = vmax.f32 %v630, 0.0
          %v663 = vmax.f32 %v631, 0.0
          %v664 = vmax.f32 %v632, 0.0
          %v665 = vmax.f32 %v633, 0.0
          %v666 = vmax.f32 %v634, 0.0
          %v667 = vmax.f32 %v635, 0.0
          %v668 = vmax.f32 %v636, 0.0
          %v669 = vmax.f32 %v637, 0.0
          %v670 = vmax.f32 %v638, 0.0
          %v671 = vmax.f32 %v639, 0.0
          %v672 = vmax.f32 %v640, 0.0
          %v673 = vmax.f32 %v641, 0.0
          %v674 = vmax.f32 %v642, 0.0
          %v675 = vmax.f32 %v643, 0.0
          %v676 = vmax.f32 %v644, 0.0
          %v677 = vmax.f32 %v645, 0.0
          %v678 = vmax.f32 %v646, 0.0
          %v679 = vmax.f32 %v647, 0.0
          %v680 = vmax.f32 %v648, 0.0
          %v681 = vmax.f32 %v649, 0.0
          %v682 = vmax.f32 %v650, 0.0
          %v683 = vmax.f32 %v651, 0.0
          %v684 = vmax.f32 %v652, 0.0
          %v685 = vmax.f32 %v653, 0.0
          %v686 = vmax.f32 %v654, 0.0
          %v687 = vmax.f32 %v655, 0.0
          %v688 = vmax.f32 %v656, 0.0
          %v689 = vmax.f32 %v657, 0.0
          %v690 = vmax.f32 %v658, 0.0
          %v691 = vmax.f32 %v659, 0.0
          %v692 = vmax.f32 %v660, 0.0
          %v693 = vadd.f32 %v661, 1e-05
          %v694 = vadd.f32 %v662, 1e-05
          %v695 = vadd.f32 %v663, 1e-05
          %v696 = vadd.f32 %v664, 1e-05
          %v697 = vadd.f32 %v665, 1e-05
          %v698 = vadd.f32 %v666, 1e-05
          %v699 = vadd.f32 %v667, 1e-05
          %v700 = vadd.f32 %v668, 1e-05
          %v701 = vadd.f32 %v669, 1e-05
          %v702 = vadd.f32 %v670, 1e-05
          %v703 = vadd.f32 %v671, 1e-05
          %v704 = vadd.f32 %v672, 1e-05
          %v705 = vadd.f32 %v673, 1e-05
          %v706 = vadd.f32 %v674, 1e-05
          %v707 = vadd.f32 %v675, 1e-05
          %v708 = vadd.f32 %v676, 1e-05
          %v709 = vadd.f32 %v677, 1e-05
          %v710 = vadd.f32 %v678, 1e-05
          %v711 = vadd.f32 %v679, 1e-05
          %v712 = vadd.f32 %v680, 1e-05
          %v713 = vadd.f32 %v681, 1e-05
          %v714 = vadd.f32 %v682, 1e-05
          %v715 = vadd.f32 %v683, 1e-05
          %v716 = vadd.f32 %v684, 1e-05
          %v717 = vadd.f32 %v685, 1e-05
          %v718 = vadd.f32 %v686, 1e-05
          %v719 = vadd.f32 %v687, 1e-05
          %v720 = vadd.f32 %v688, 1e-05
          %v721 = vadd.f32 %v689, 1e-05
          %v722 = vadd.f32 %v690, 1e-05
          %v723 = vadd.f32 %v691, 1e-05
          %v724 = vadd.f32 %v692, 1e-05
          %v725 = vrsqrt.pop %v693
          %v726 = vrsqrt.pop %v694
          %v727 = vrsqrt.pop %v695
          %v728 = vrsqrt.pop %v696
          %v729 = vrsqrt.pop %v697
          %v730 = vrsqrt.pop %v698
          %v731 = vrsqrt.pop %v699
          %v732 = vrsqrt.pop %v700
          %v733 = vrsqrt.pop %v701
          %v734 = vrsqrt.pop %v702
          %v735 = vrsqrt.pop %v703
          %v736 = vrsqrt.pop %v704
          %v737 = vrsqrt.pop %v705
          %v738 = vrsqrt.pop %v706
          %v739 = vrsqrt.pop %v707
          %v740 = vrsqrt.pop %v708
          %v741 = vrsqrt.pop %v709
          %v742 = vrsqrt.pop %v710
          %v743 = vrsqrt.pop %v711
          %v744 = vrsqrt.pop %v712
          %v745 = vrsqrt.pop %v713
          %v746 = vrsqrt.pop %v714
          %v747 = vrsqrt.pop %v715
          %v748 = vrsqrt.pop %v716
          %v749 = vrsqrt.pop %v717
          %v750 = vrsqrt.pop %v718
          %v751 = vrsqrt.pop %v719
          %v752 = vrsqrt.pop %v720
          %v753 = vrsqrt.pop %v721
          %v754 = vrsqrt.pop %v722
          %v755 = vrsqrt.pop %v723
          %v756 = vrsqrt.pop %v724
          %v757 = vsub.f32 %v340, %v437
          %v758 = vsub.f32 %v341, %v438
          %v759 = vsub.f32 %v342, %v439
          %v760 = vsub.f32 %v343, %v440
          %v761 = vsub.f32 %v344, %v441
          %v762 = vsub.f32 %v345, %v442
          %v763 = vsub.f32 %v346, %v443
          %v764 = vsub.f32 %v347, %v444
          %v765 = vsub.f32 %v348, %v445
          %v766 = vsub.f32 %v349, %v446
          %v767 = vsub.f32 %v350, %v447
          %v768 = vsub.f32 %v351, %v448
          %v769 = vsub.f32 %v352, %v449
          %v770 = vsub.f32 %v353, %v450
          %v771 = vsub.f32 %v354, %v451
          %v772 = vsub.f32 %v355, %v452
          %v773 = vsub.f32 %v356, %v453
          %v774 = vsub.f32 %v357, %v454
          %v775 = vsub.f32 %v358, %v455
          %v776 = vsub.f32 %v359, %v456
          %v777 = vsub.f32 %v360, %v457
          %v778 = vsub.f32 %v361, %v458
          %v779 = vsub.f32 %v362, %v459
          %v780 = vsub.f32 %v363, %v460
          %v781 = vsub.f32 %v364, %v461
          %v782 = vsub.f32 %v365, %v462
          %v783 = vsub.f32 %v366, %v463
          %v784 = vsub.f32 %v367, %v464
          %v785 = vsub.f32 %v368, %v465
          %v786 = vsub.f32 %v369, %v466
          %v787 = vsub.f32 %v370, %v467
          %v788 = vsub.f32 %v371, %v468
          %v789 = vmul.f32 %v757, %v725
          %v790 = vmul.f32 %v758, %v726
          %v791 = vmul.f32 %v759, %v727
          %v792 = vmul.f32 %v760, %v728
          %v793 = vmul.f32 %v761, %v729
          %v794 = vmul.f32 %v762, %v730
          %v795 = vmul.f32 %v763, %v731
          %v796 = vmul.f32 %v764, %v732
          %v797 = vmul.f32 %v765, %v733
          %v798 = vmul.f32 %v766, %v734
          %v799 = vmul.f32 %v767, %v735
          %v800 = vmul.f32 %v768, %v736
          %v801 = vmul.f32 %v769, %v737
          %v802 = vmul.f32 %v770, %v738
          %v803 = vmul.f32 %v771, %v739
          %v804 = vmul.f32 %v772, %v740
          %v805 = vmul.f32 %v773, %v741
          %v806 = vmul.f32 %v774, %v742
          %v807 = vmul.f32 %v775, %v743
          %v808 = vmul.f32 %v776, %v744
          %v809 = vmul.f32 %v777, %v745
          %v810 = vmul.f32 %v778, %v746
          %v811 = vmul.f32 %v779, %v747
          %v812 = vmul.f32 %v780, %v748
          %v813 = vmul.f32 %v781, %v749
          %v814 = vmul.f32 %v782, %v750
          %v815 = vmul.f32 %v783, %v751
          %v816 = vmul.f32 %v784, %v752
          %v817 = vmul.f32 %v785, %v753
          %v818 = vmul.f32 %v786, %v754
          %v819 = vmul.f32 %v787, %v755
          %v820 = vmul.f32 %v788, %v756
          %v821 = vld [vmem:[%s1] sm:$0x1]
          %v823 = vlaneseq
          %v824 = vshrl.u32 %v823, 7
          %v825 = vsub.s32 0, %v824
          %v826 = vrot.slane %v821, %v825
          %v828 = vmul.f32 %v789, %v826
          %v829 = vmul.f32 %v790, %v826
          %v830 = vmul.f32 %v791, %v826
          %v831 = vmul.f32 %v792, %v826
          %v832 = vmul.f32 %v793, %v826
          %v833 = vmul.f32 %v794, %v826
          %v834 = vmul.f32 %v795, %v826
          %v835 = vmul.f32 %v796, %v826
          %v836 = vmul.f32 %v797, %v826
          %v837 = vmul.f32 %v798, %v826
          %v838 = vmul.f32 %v799, %v826
          %v839 = vmul.f32 %v800, %v826
          %v840 = vmul.f32 %v801, %v826
          %v841 = vmul.f32 %v802, %v826
          %v842 = vmul.f32 %v803, %v826
          %v843 = vmul.f32 %v804, %v826
          %v844 = vmul.f32 %v805, %v826
          %v845 = vmul.f32 %v806, %v826
          %v846 = vmul.f32 %v807, %v826
          %v847 = vmul.f32 %v808, %v826
          %v848 = vmul.f32 %v809, %v826
          %v849 = vmul.f32 %v810, %v826
          %v850 = vmul.f32 %v811, %v826
          %v851 = vmul.f32 %v812, %v826
          %v852 = vmul.f32 %v813, %v826
          %v853 = vmul.f32 %v814, %v826
          %v854 = vmul.f32 %v815, %v826
          %v855 = vmul.f32 %v816, %v826
          %v856 = vmul.f32 %v817, %v826
          %v857 = vmul.f32 %v818, %v826
          %v858 = vmul.f32 %v819, %v826
          %v859 = vmul.f32 %v820, %v826
          %v860 = vld [vmem:[%s2] sm:$0x1]
          %v862 = vlaneseq
          %v863 = vshrl.u32 %v862, 7
          %v864 = vsub.s32 0, %v863
          %v865 = vrot.slane %v860, %v864
          %v867 = vadd.f32 %v828, %v865
          %v868 = vadd.f32 %v829, %v865
          %v869 = vadd.f32 %v830, %v865
          %v870 = vadd.f32 %v831, %v865
          %v871 = vadd.f32 %v832, %v865
          %v872 = vadd.f32 %v833, %v865
          %v873 = vadd.f32 %v834, %v865
          %v874 = vadd.f32 %v835, %v865
          %v875 = vadd.f32 %v836, %v865
          %v876 = vadd.f32 %v837, %v865
          %v877 = vadd.f32 %v838, %v865
          %v878 = vadd.f32 %v839, %v865
          %v879 = vadd.f32 %v840, %v865
          %v880 = vadd.f32 %v841, %v865
          %v881 = vadd.f32 %v842, %v865
          %v882 = vadd.f32 %v843, %v865
          %v883 = vadd.f32 %v844, %v865
          %v884 = vadd.f32 %v845, %v865
          %v885 = vadd.f32 %v846, %v865
          %v886 = vadd.f32 %v847, %v865
          %v887 = vadd.f32 %v848, %v865
          %v888 = vadd.f32 %v849, %v865
          %v889 = vadd.f32 %v850, %v865
          %v890 = vadd.f32 %v851, %v865
          %v891 = vadd.f32 %v852, %v865
          %v892 = vadd.f32 %v853, %v865
          %v893 = vadd.f32 %v854, %v865
          %v894 = vadd.f32 %v855, %v865
          %v895 = vadd.f32 %v856, %v865
          %v896 = vadd.f32 %v857, %v865
          %v897 = vadd.f32 %v858, %v865
          %v898 = vadd.f32 %v859, %v865
          %v899 = vpack.c.bf16 %v868, %v867
          %v900 = vpack.c.bf16 %v870, %v869
          %v901 = vpack.c.bf16 %v872, %v871
          %v902 = vpack.c.bf16 %v874, %v873
          %v903 = vpack.c.bf16 %v876, %v875
          %v904 = vpack.c.bf16 %v878, %v877
          %v905 = vpack.c.bf16 %v880, %v879
          %v906 = vpack.c.bf16 %v882, %v881
          %v907 = vpack.c.bf16 %v884, %v883
          %v908 = vpack.c.bf16 %v886, %v885
          %v909 = vpack.c.bf16 %v888, %v887
          %v910 = vpack.c.bf16 %v890, %v889
          %v911 = vpack.c.bf16 %v892, %v891
          %v912 = vpack.c.bf16 %v894, %v893
          %v913 = vpack.c.bf16 %v896, %v895
          %v914 = vpack.c.bf16 %v898, %v897
          %915 = vst [vmem:[#allocation2] sm:$0xff] %v899
          %916 = vst [vmem:[#allocation2 + $0x8] sm:$0xff] %v900
          %917 = vst [vmem:[#allocation2 + $0x10] sm:$0xff] %v901
          %918 = vst [vmem:[#allocation2 + $0x18] sm:$0xff] %v902
          %919 = vst [vmem:[#allocation2 + $0x20] sm:$0xff] %v903
          %920 = vst [vmem:[#allocation2 + $0x28] sm:$0xff] %v904
          %921 = vst [vmem:[#allocation2 + $0x30] sm:$0xff] %v905
          %922 = vst [vmem:[#allocation2 + $0x38] sm:$0xff] %v906
          %923 = vst [vmem:[#allocation2 + $0x40] sm:$0xff] %v907
          %924 = vst [vmem:[#allocation2 + $0x48] sm:$0xff] %v908
          %925 = vst [vmem:[#allocation2 + $0x50] sm:$0xff] %v909
          %926 = vst [vmem:[#allocation2 + $0x58] sm:$0xff] %v910
          %927 = vst [vmem:[#allocation2 + $0x60] sm:$0xff] %v911
          %928 = vst [vmem:[#allocation2 + $0x68] sm:$0xff] %v912
          %929 = vst [vmem:[#allocation2 + $0x70] sm:$0xff] %v913
          %930 = vst [vmem:[#allocation2 + $0x78] sm:$0xff] %v914
        $region52: #{pernorm_forward.1} parent=39 // pred_fallthru
          _
        %v931 = vld [vmem:[#allocation2] sm:$0xff]
        %v932 = vld [vmem:[#allocation2 + $0x8] sm:$0xff]
        %v933 = vld [vmem:[#allocation2 + $0x10] sm:$0xff]
        %v934 = vld [vmem:[#allocation2 + $0x18] sm:$0xff]
        %v935 = vld [vmem:[#allocation2 + $0x20] sm:$0xff]
        %v936 = vld [vmem:[#allocation2 + $0x28] sm:$0xff]
        %v937 = vld [vmem:[#allocation2 + $0x30] sm:$0xff]
        %v938 = vld [vmem:[#allocation2 + $0x38] sm:$0xff]
        %v939 = vld [vmem:[#allocation2 + $0x40] sm:$0xff]
        %v940 = vld [vmem:[#allocation2 + $0x48] sm:$0xff]
        %v941 = vld [vmem:[#allocation2 + $0x50] sm:$0xff]
        %v942 = vld [vmem:[#allocation2 + $0x58] sm:$0xff]
        %v943 = vld [vmem:[#allocation2 + $0x60] sm:$0xff]
        %v944 = vld [vmem:[#allocation2 + $0x68] sm:$0xff]
        %v945 = vld [vmem:[#allocation2 + $0x70] sm:$0xff]
        %v946 = vld [vmem:[#allocation2 + $0x78] sm:$0xff]
        %v947 = vld [vmem:[#allocation6] sm:$0xff]
        %v948 = vld [vmem:[#allocation6 + $0x8] sm:$0xff]
        %v949 = vld [vmem:[#allocation6 + $0x10] sm:$0xff]
        %v950 = vld [vmem:[#allocation6 + $0x18] sm:$0xff]
        %v951 = vld [vmem:[#allocation6 + $0x20] sm:$0xff]
        %v952 = vld [vmem:[#allocation6 + $0x28] sm:$0xff]
        %v953 = vld [vmem:[#allocation6 + $0x30] sm:$0xff]
        %v954 = vld [vmem:[#allocation6 + $0x38] sm:$0xff]
        %v955 = vld [vmem:[#allocation6 + $0x40] sm:$0xff]
        %v956 = vld [vmem:[#allocation6 + $0x48] sm:$0xff]
        %v957 = vld [vmem:[#allocation6 + $0x50] sm:$0xff]
        %v958 = vld [vmem:[#allocation6 + $0x58] sm:$0xff]
        %v959 = vld [vmem:[#allocation6 + $0x60] sm:$0xff]
        %v960 = vld [vmem:[#allocation6 + $0x68] sm:$0xff]
        %v961 = vld [vmem:[#allocation6 + $0x70] sm:$0xff]
        %v962 = vld [vmem:[#allocation6 + $0x78] sm:$0xff]
        %v963 = vld [vmem:[%s299] sm:$0x3]
        %v965 = vlaneseq
        %v966 = vshrl.u32 %v965, 7
        %v967 = vsub.s32 0, %v966
        %v968 = vrot.slane %v963, %v967
        %v969 = vlaneseq
        %v970 = vshrl.u32 %v969, 7
        %v971 = vsub.s32 1, %v970
        %v972 = vrot.slane %v963, %v971
        %v991 = vunpack.c.l.b16 %v947
        %v992 = vunpack.c.h.b16 %v947
        %v993 = vunpack.c.l.b16 %v948
        %v994 = vunpack.c.h.b16 %v948
        %v995 = vunpack.c.l.b16 %v949
        %v996 = vunpack.c.h.b16 %v949
        %v997 = vunpack.c.l.b16 %v950
        %v998 = vunpack.c.h.b16 %v950
        %v999 = vunpack.c.l.b16 %v951
        %v1000 = vunpack.c.h.b16 %v951
        %v1001 = vunpack.c.l.b16 %v952
        %v1002 = vunpack.c.h.b16 %v952
        %v1003 = vunpack.c.l.b16 %v953
        %v1004 = vunpack.c.h.b16 %v953
        %v1005 = vunpack.c.l.b16 %v954
        %v1006 = vunpack.c.h.b16 %v954
        %v1007 = vunpack.c.l.b16 %v955
        %v1008 = vunpack.c.h.b16 %v955
        %v1009 = vunpack.c.l.b16 %v956
        %v1010 = vunpack.c.h.b16 %v956
        %v1011 = vunpack.c.l.b16 %v957
        %v1012 = vunpack.c.h.b16 %v957
        %v1013 = vunpack.c.l.b16 %v958
        %v1014 = vunpack.c.h.b16 %v958
        %v1015 = vunpack.c.l.b16 %v959
        %v1016 = vunpack.c.h.b16 %v959
        %v1017 = vunpack.c.l.b16 %v960
        %v1018 = vunpack.c.h.b16 %v960
        %v1019 = vunpack.c.l.b16 %v961
        %v1020 = vunpack.c.h.b16 %v961
        %v1021 = vunpack.c.l.b16 %v962
        %v1022 = vunpack.c.h.b16 %v962
        %v1023 = vpack.c.b16 %v993, %v991
        %v1024 = vpack.c.b16 %v994, %v992
        %v1025 = vpack.c.b16 %v997, %v995
        %v1026 = vpack.c.b16 %v998, %v996
        %v1027 = vpack.c.b16 %v1001, %v999
        %v1028 = vpack.c.b16 %v1002, %v1000
        %v1029 = vpack.c.b16 %v1005, %v1003
        %v1030 = vpack.c.b16 %v1006, %v1004
        %v1031 = vpack.c.b16 %v1009, %v1007
        %v1032 = vpack.c.b16 %v1010, %v1008
        %v1033 = vpack.c.b16 %v1013, %v1011
        %v1034 = vpack.c.b16 %v1014, %v1012
        %v1035 = vpack.c.b16 %v1017, %v1015
        %v1036 = vpack.c.b16 %v1018, %v1016
        %v1037 = vpack.c.b16 %v1021, %v1019
        %v1038 = vpack.c.b16 %v1022, %v1020
        %1055 = vmatprep.subr.bf16.mxu0 %v1024
        %1056 = vmatpush1.bf16.msra.mxu0 %v1023
        %1057 = vmatprep.subr.bf16.mxu0 %v1026
        %1058 = vmatpush1.bf16.msra.mxu0 %v1025
        %1059 = vmatprep.subr.bf16.mxu0 %v1028
        %1060 = vmatpush1.bf16.msra.mxu0 %v1027
        %1061 = vmatprep.subr.bf16.mxu0 %v1030
        %1062 = vmatpush1.bf16.msra.mxu0 %v1029
        %1063 = vmatprep.subr.bf16.mxu0 %v1032
        %1064 = vmatpush1.bf16.msra.mxu0 %v1031
        %1065 = vmatprep.subr.bf16.mxu0 %v1034
        %1066 = vmatpush1.bf16.msra.mxu0 %v1033
        %1067 = vmatprep.subr.bf16.mxu0 %v1036
        %1068 = vmatpush1.bf16.msra.mxu0 %v1035
        %1069 = vmatprep.subr.bf16.mxu0 %v1038
        %1070 = vmatpush1.bf16.msra.mxu0 %v1037
        %1071 = vmatprep.subr.bf16.mxu0 0
        %1072 = vmatpush1.bf16.msra.mxu0 0
        %1073 = vmatprep.subr.bf16.mxu0 0
        %1074 = vmatpush1.bf16.msra.mxu0 0
        %1075 = vmatprep.subr.bf16.mxu0 0
        %1076 = vmatpush1.bf16.msra.mxu0 0
        %1077 = vmatprep.subr.bf16.mxu0 0
        %1078 = vmatpush1.bf16.msra.mxu0 0
        %1079 = vmatprep.subr.bf16.mxu0 0
        %1080 = vmatpush1.bf16.msra.mxu0 0
        %1081 = vmatprep.subr.bf16.mxu0 0
        %1082 = vmatpush1.bf16.msra.mxu0 0
        %1083 = vmatprep.subr.bf16.mxu0 0
        %1084 = vmatpush1.bf16.msra.mxu0 0
        %1085 = vmatprep.subr.bf16.mxu0 0
        %1086 = vmatpush1.bf16.msra.mxu0 0
        %1087 = vmatprep.mubr.bf16.mxu0 0
        %1088 = vmatmul.mubr.bf16.gmra.mrb[0].mxu0 %v931
        %v1089 = vpop.f32.mrb[0].mxu0
        %v1090 = vadd.f32 %v968, %v1089
        %v1091 = vpop.f32.mrb[0].mxu0
        %v1092 = vadd.f32 %v972, %v1091
        %v1093 = vpop.f32.mrb[0].mxu0
        %v1094 = vadd.f32 %v968, %v1093
        %v1095 = vpop.f32.mrb[0].mxu0
        %v1096 = vadd.f32 %v972, %v1095
        %1097 = vmatprep.mubr.bf16.mxu0 0
        %1098 = vmatmul.mubr.bf16.gmra.mrb[0].mxu0 %v932
        %v1099 = vpop.f32.mrb[0].mxu0
        %v1100 = vadd.f32 %v968, %v1099
        %v1101 = vpop.f32.mrb[0].mxu0
        %v1102 = vadd.f32 %v972, %v1101
        %v1103 = vpop.f32.mrb[0].mxu0
        %v1104 = vadd.f32 %v968, %v1103
        %v1105 = vpop.f32.mrb[0].mxu0
        %v1106 = vadd.f32 %v972, %v1105
        %1107 = vmatprep.mubr.bf16.mxu0 0
        %1108 = vmatmul.mubr.bf16.gmra.mrb[0].mxu0 %v933
        %v1109 = vpop.f32.mrb[0].mxu0
        %v1110 = vadd.f32 %v968, %v1109
        %v1111 = vpop.f32.mrb[0].mxu0
        %v1112 = vadd.f32 %v972, %v1111
        %v1113 = vpop.f32.mrb[0].mxu0
        %v1114 = vadd.f32 %v968, %v1113
        %v1115 = vpop.f32.mrb[0].mxu0
        %v1116 = vadd.f32 %v972, %v1115
        %1117 = vmatprep.mubr.bf16.mxu0 0
        %1118 = vmatmul.mubr.bf16.gmra.mrb[0].mxu0 %v934
        %v1119 = vpop.f32.mrb[0].mxu0
        %v1120 = vadd.f32 %v968, %v1119
        %v1121 = vpop.f32.mrb[0].mxu0
        %v1122 = vadd.f32 %v972, %v1121
        %v1123 = vpop.f32.mrb[0].mxu0
        %v1124 = vadd.f32 %v968, %v1123
        %v1125 = vpop.f32.mrb[0].mxu0
        %v1126 = vadd.f32 %v972, %v1125
        %1127 = vmatprep.mubr.bf16.mxu0 0
        %1128 = vmatmul.mubr.bf16.gmra.mrb[0].mxu0 %v935
        %v1129 = vpop.f32.mrb[0].mxu0
        %v1130 = vadd.f32 %v968, %v1129
        %v1131 = vpop.f32.mrb[0].mxu0
        %v1132 = vadd.f32 %v972, %v1131
        %v1133 = vpop.f32.mrb[0].mxu0
        %v1134 = vadd.f32 %v968, %v1133
        %v1135 = vpop.f32.mrb[0].mxu0
        %v1136 = vadd.f32 %v972, %v1135
        %1137 = vmatprep.mubr.bf16.mxu0 0
        %1138 = vmatmul.mubr.bf16.gmra.mrb[0].mxu0 %v936
        %v1139 = vpop.f32.mrb[0].mxu0
        %v1140 = vadd.f32 %v968, %v1139
        %v1141 = vpop.f32.mrb[0].mxu0
        %v1142 = vadd.f32 %v972, %v1141
        %v1143 = vpop.f32.mrb[0].mxu0
        %v1144 = vadd.f32 %v968, %v1143
        %v1145 = vpop.f32.mrb[0].mxu0
        %v1146 = vadd.f32 %v972, %v1145
        %1147 = vmatprep.mubr.bf16.mxu0 0
        %1148 = vmatmul.mubr.bf16.gmra.mrb[0].mxu0 %v937
        %v1149 = vpop.f32.mrb[0].mxu0
        %v1150 = vadd.f32 %v968, %v1149
        %v1151 = vpop.f32.mrb[0].mxu0
        %v1152 = vadd.f32 %v972, %v1151
        %v1153 = vpop.f32.mrb[0].mxu0
        %v1154 = vadd.f32 %v968, %v1153
        %v1155 = vpop.f32.mrb[0].mxu0
        %v1156 = vadd.f32 %v972, %v1155
        %1157 = vmatprep.mubr.bf16.mxu0 0
        %1158 = vmatmul.mubr.bf16.gmra.mrb[0].mxu0 %v938
        %v1159 = vpop.f32.mrb[0].mxu0
        %v1160 = vadd.f32 %v968, %v1159
        %v1161 = vpop.f32.mrb[0].mxu0
        %v1162 = vadd.f32 %v972, %v1161
        %v1163 = vpop.f32.mrb[0].mxu0
        %v1164 = vadd.f32 %v968, %v1163
        %v1165 = vpop.f32.mrb[0].mxu0
        %v1166 = vadd.f32 %v972, %v1165
        %1167 = vmatprep.mubr.bf16.mxu0 0
        %1168 = vmatmul.mubr.bf16.gmra.mrb[0].mxu0 %v939
        %v1169 = vpop.f32.mrb[0].mxu0
        %v1170 = vadd.f32 %v968, %v1169
        %v1171 = vpop.f32.mrb[0].mxu0
        %v1172 = vadd.f32 %v972, %v1171
        %v1173 = vpop.f32.mrb[0].mxu0
        %v1174 = vadd.f32 %v968, %v1173
        %v1175 = vpop.f32.mrb[0].mxu0
        %v1176 = vadd.f32 %v972, %v1175
        %1177 = vmatprep.mubr.bf16.mxu0 0
        %1178 = vmatmul.mubr.bf16.gmra.mrb[0].mxu0 %v940
        %v1179 = vpop.f32.mrb[0].mxu0
        %v1180 = vadd.f32 %v968, %v1179
        %v1181 = vpop.f32.mrb[0].mxu0
        %v1182 = vadd.f32 %v972, %v1181
        %v1183 = vpop.f32.mrb[0].mxu0
        %v1184 = vadd.f32 %v968, %v1183
        %v1185 = vpop.f32.mrb[0].mxu0
        %v1186 = vadd.f32 %v972, %v1185
        %1187 = vmatprep.mubr.bf16.mxu0 0
        %1188 = vmatmul.mubr.bf16.gmra.mrb[0].mxu0 %v941
        %v1189 = vpop.f32.mrb[0].mxu0
        %v1190 = vadd.f32 %v968, %v1189
        %v1191 = vpop.f32.mrb[0].mxu0
        %v1192 = vadd.f32 %v972, %v1191
        %v1193 = vpop.f32.mrb[0].mxu0
        %v1194 = vadd.f32 %v968, %v1193
        %v1195 = vpop.f32.mrb[0].mxu0
        %v1196 = vadd.f32 %v972, %v1195
        %1197 = vmatprep.mubr.bf16.mxu0 0
        %1198 = vmatmul.mubr.bf16.gmra.mrb[0].mxu0 %v942
        %v1199 = vpop.f32.mrb[0].mxu0
        %v1200 = vadd.f32 %v968, %v1199
        %v1201 = vpop.f32.mrb[0].mxu0
        %v1202 = vadd.f32 %v972, %v1201
        %v1203 = vpop.f32.mrb[0].mxu0
        %v1204 = vadd.f32 %v968, %v1203
        %v1205 = vpop.f32.mrb[0].mxu0
        %v1206 = vadd.f32 %v972, %v1205
        %1207 = vmatprep.mubr.bf16.mxu0 0
        %1208 = vmatmul.mubr.bf16.gmra.mrb[0].mxu0 %v943
        %v1209 = vpop.f32.mrb[0].mxu0
        %v1210 = vadd.f32 %v968, %v1209
        %v1211 = vpop.f32.mrb[0].mxu0
        %v1212 = vadd.f32 %v972, %v1211
        %v1213 = vpop.f32.mrb[0].mxu0
        %v1214 = vadd.f32 %v968, %v1213
        %v1215 = vpop.f32.mrb[0].mxu0
        %v1216 = vadd.f32 %v972, %v1215
        %1217 = vmatprep.mubr.bf16.mxu0 0
        %1218 = vmatmul.mubr.bf16.gmra.mrb[0].mxu0 %v944
        %v1219 = vpop.f32.mrb[0].mxu0
        %v1220 = vadd.f32 %v968, %v1219
        %v1221 = vpop.f32.mrb[0].mxu0
        %v1222 = vadd.f32 %v972, %v1221
        %v1223 = vpop.f32.mrb[0].mxu0
        %v1224 = vadd.f32 %v968, %v1223
        %v1225 = vpop.f32.mrb[0].mxu0
        %v1226 = vadd.f32 %v972, %v1225
        %1227 = vmatprep.mubr.bf16.mxu0 0
        %1228 = vmatmul.mubr.bf16.gmra.mrb[0].mxu0 %v945
        %v1229 = vpop.f32.mrb[0].mxu0
        %v1230 = vadd.f32 %v968, %v1229
        %v1231 = vpop.f32.mrb[0].mxu0
        %v1232 = vadd.f32 %v972, %v1231
        %v1233 = vpop.f32.mrb[0].mxu0
        %v1234 = vadd.f32 %v968, %v1233
        %v1235 = vpop.f32.mrb[0].mxu0
        %v1236 = vadd.f32 %v972, %v1235
        %1237 = vmatprep.mubr.bf16.mxu0 0
        %1238 = vmatmul.mubr.bf16.gmra.mrb[0].mxu0 %v946
        %v1239 = vpop.f32.mrb[0].mxu0
        %v1240 = vadd.f32 %v968, %v1239
        %v1241 = vpop.f32.mrb[0].mxu0
        %v1242 = vadd.f32 %v972, %v1241
        %v1243 = vpop.f32.mrb[0].mxu0
        %v1244 = vadd.f32 %v968, %v1243
        %v1245 = vpop.f32.mrb[0].mxu0
        %v1246 = vadd.f32 %v972, %v1245
        %1247 = vdwg.mxu0
        %v1248 = vpack.c.bf16 %v1094, %v1090
        %v1249 = vpack.c.bf16 %v1096, %v1092
        %v1250 = vpack.c.bf16 %v1104, %v1100
        %v1251 = vpack.c.bf16 %v1106, %v1102
        %v1252 = vpack.c.bf16 %v1114, %v1110
        %v1253 = vpack.c.bf16 %v1116, %v1112
        %v1254 = vpack.c.bf16 %v1124, %v1120
        %v1255 = vpack.c.bf16 %v1126, %v1122
        %v1256 = vpack.c.bf16 %v1134, %v1130
        %v1257 = vpack.c.bf16 %v1136, %v1132
        %v1258 = vpack.c.bf16 %v1144, %v1140
        %v1259 = vpack.c.bf16 %v1146, %v1142
        %v1260 = vpack.c.bf16 %v1154, %v1150
        %v1261 = vpack.c.bf16 %v1156, %v1152
        %v1262 = vpack.c.bf16 %v1164, %v1160
        %v1263 = vpack.c.bf16 %v1166, %v1162
        %v1264 = vpack.c.bf16 %v1174, %v1170
        %v1265 = vpack.c.bf16 %v1176, %v1172
        %v1266 = vpack.c.bf16 %v1184, %v1180
        %v1267 = vpack.c.bf16 %v1186, %v1182
        %v1268 = vpack.c.bf16 %v1194, %v1190
        %v1269 = vpack.c.bf16 %v1196, %v1192
        %v1270 = vpack.c.bf16 %v1204, %v1200
        %v1271 = vpack.c.bf16 %v1206, %v1202
        %v1272 = vpack.c.bf16 %v1214, %v1210
        %v1273 = vpack.c.bf16 %v1216, %v1212
        %v1274 = vpack.c.bf16 %v1224, %v1220
        %v1275 = vpack.c.bf16 %v1226, %v1222
        %v1276 = vpack.c.bf16 %v1234, %v1230
        %v1277 = vpack.c.bf16 %v1236, %v1232
        %v1278 = vpack.c.bf16 %v1244, %v1240
        %v1279 = vpack.c.bf16 %v1246, %v1242
        %v1312 = vunpack.c.l.b16 %v1248
        %v1313 = vunpack.c.l.b16 %v1249
        %v1314 = vunpack.c.h.b16 %v1248
        %v1315 = vunpack.c.h.b16 %v1249
        %v1316 = vunpack.c.l.b16 %v1250
        %v1317 = vunpack.c.l.b16 %v1251
        %v1318 = vunpack.c.h.b16 %v1250
        %v1319 = vunpack.c.h.b16 %v1251
        %v1320 = vunpack.c.l.b16 %v1252
        %v1321 = vunpack.c.l.b16 %v1253
        %v1322 = vunpack.c.h.b16 %v1252
        %v1323 = vunpack.c.h.b16 %v1253
        %v1324 = vunpack.c.l.b16 %v1254
        %v1325 = vunpack.c.l.b16 %v1255
        %v1326 = vunpack.c.h.b16 %v1254
        %v1327 = vunpack.c.h.b16 %v1255
        %v1328 = vunpack.c.l.b16 %v1256
        %v1329 = vunpack.c.l.b16 %v1257
        %v1330 = vunpack.c.h.b16 %v1256
        %v1331 = vunpack.c.h.b16 %v1257
        %v1332 = vunpack.c.l.b16 %v1258
        %v1333 = vunpack.c.l.b16 %v1259
        %v1334 = vunpack.c.h.b16 %v1258
        %v1335 = vunpack.c.h.b16 %v1259
        %v1336 = vunpack.c.l.b16 %v1260
        %v1337 = vunpack.c.l.b16 %v1261
        %v1338 = vunpack.c.h.b16 %v1260
        %v1339 = vunpack.c.h.b16 %v1261
        %v1340 = vunpack.c.l.b16 %v1262
        %v1341 = vunpack.c.l.b16 %v1263
        %v1342 = vunpack.c.h.b16 %v1262
        %v1343 = vunpack.c.h.b16 %v1263
        %v1344 = vunpack.c.l.b16 %v1264
        %v1345 = vunpack.c.l.b16 %v1265
        %v1346 = vunpack.c.h.b16 %v1264
        %v1347 = vunpack.c.h.b16 %v1265
        %v1348 = vunpack.c.l.b16 %v1266
        %v1349 = vunpack.c.l.b16 %v1267
        %v1350 = vunpack.c.h.b16 %v1266
        %v1351 = vunpack.c.h.b16 %v1267
        %v1352 = vunpack.c.l.b16 %v1268
        %v1353 = vunpack.c.l.b16 %v1269
        %v1354 = vunpack.c.h.b16 %v1268
        %v1355 = vunpack.c.h.b16 %v1269
        %v1356 = vunpack.c.l.b16 %v1270
        %v1357 = vunpack.c.l.b16 %v1271
        %v1358 = vunpack.c.h.b16 %v1270
        %v1359 = vunpack.c.h.b16 %v1271
        %v1360 = vunpack.c.l.b16 %v1272
        %v1361 = vunpack.c.l.b16 %v1273
        %v1362 = vunpack.c.h.b16 %v1272
        %v1363 = vunpack.c.h.b16 %v1273
        %v1364 = vunpack.c.l.b16 %v1274
        %v1365 = vunpack.c.l.b16 %v1275
        %v1366 = vunpack.c.h.b16 %v1274
        %v1367 = vunpack.c.h.b16 %v1275
        %v1368 = vunpack.c.l.b16 %v1276
        %v1369 = vunpack.c.l.b16 %v1277
        %v1370 = vunpack.c.h.b16 %v1276
        %v1371 = vunpack.c.h.b16 %v1277
        %v1372 = vunpack.c.l.b16 %v1278
        %v1373 = vunpack.c.l.b16 %v1279
        %v1374 = vunpack.c.h.b16 %v1278
        %v1375 = vunpack.c.h.b16 %v1279
        %v1376 = vpack.c.b16 %v1313, %v1312
        %v1377 = vpack.c.b16 %v1315, %v1314
        %v1378 = vpack.c.b16 %v1317, %v1316
        %v1379 = vpack.c.b16 %v1319, %v1318
        %v1380 = vpack.c.b16 %v1321, %v1320
        %v1381 = vpack.c.b16 %v1323, %v1322
        %v1382 = vpack.c.b16 %v1325, %v1324
        %v1383 = vpack.c.b16 %v1327, %v1326
        %v1384 = vpack.c.b16 %v1329, %v1328
        %v1385 = vpack.c.b16 %v1331, %v1330
        %v1386 = vpack.c.b16 %v1333, %v1332
        %v1387 = vpack.c.b16 %v1335, %v1334
        %v1388 = vpack.c.b16 %v1337, %v1336
        %v1389 = vpack.c.b16 %v1339, %v1338
        %v1390 = vpack.c.b16 %v1341, %v1340
        %v1391 = vpack.c.b16 %v1343, %v1342
        %v1392 = vpack.c.b16 %v1345, %v1344
        %v1393 = vpack.c.b16 %v1347, %v1346
        %v1394 = vpack.c.b16 %v1349, %v1348
        %v1395 = vpack.c.b16 %v1351, %v1350
        %v1396 = vpack.c.b16 %v1353, %v1352
        %v1397 = vpack.c.b16 %v1355, %v1354
        %v1398 = vpack.c.b16 %v1357, %v1356
        %v1399 = vpack.c.b16 %v1359, %v1358
        %v1400 = vpack.c.b16 %v1361, %v1360
        %v1401 = vpack.c.b16 %v1363, %v1362
        %v1402 = vpack.c.b16 %v1365, %v1364
        %v1403 = vpack.c.b16 %v1367, %v1366
        %v1404 = vpack.c.b16 %v1369, %v1368
        %v1405 = vpack.c.b16 %v1371, %v1370
        %v1406 = vpack.c.b16 %v1373, %v1372
        %v1407 = vpack.c.b16 %v1375, %v1374
        %1440 = vst [vmem:[%s293] sm:$0xff] %v1376
        %1441 = vst [vmem:[%s293 + $0x8] sm:$0xff] %v1377
        %1442 = vst [vmem:[%s293 + $0x10] sm:$0xff] %v1378
        %1443 = vst [vmem:[%s293 + $0x18] sm:$0xff] %v1379
        %1444 = vst [vmem:[%s293 + $0x20] sm:$0xff] %v1380
        %1445 = vst [vmem:[%s293 + $0x28] sm:$0xff] %v1381
        %1446 = vst [vmem:[%s293 + $0x30] sm:$0xff] %v1382
        %1447 = vst [vmem:[%s293 + $0x38] sm:$0xff] %v1383
        %1448 = vst [vmem:[%s293 + $0x40] sm:$0xff] %v1384
        %1449 = vst [vmem:[%s293 + $0x48] sm:$0xff] %v1385
        %1450 = vst [vmem:[%s293 + $0x50] sm:$0xff] %v1386
        %1451 = vst [vmem:[%s293 + $0x58] sm:$0xff] %v1387
        %1452 = vst [vmem:[%s293 + $0x60] sm:$0xff] %v1388
        %1453 = vst [vmem:[%s293 + $0x68] sm:$0xff] %v1389
        %1454 = vst [vmem:[%s293 + $0x70] sm:$0xff] %v1390
        %1455 = vst [vmem:[%s293 + $0x78] sm:$0xff] %v1391
        %1456 = vst [vmem:[%s293 + $0x80] sm:$0xff] %v1392
        %1457 = vst [vmem:[%s293 + $0x88] sm:$0xff] %v1393
        %1458 = vst [vmem:[%s293 + $0x90] sm:$0xff] %v1394
        %1459 = vst [vmem:[%s293 + $0x98] sm:$0xff] %v1395
        %1460 = vst [vmem:[%s293 + $0xa0] sm:$0xff] %v1396
        %1461 = vst [vmem:[%s293 + $0xa8] sm:$0xff] %v1397
        %1462 = vst [vmem:[%s293 + $0xb0] sm:$0xff] %v1398
        %1463 = vst [vmem:[%s293 + $0xb8] sm:$0xff] %v1399
        %1464 = vst [vmem:[%s293 + $0xc0] sm:$0xff] %v1400
        %1465 = vst [vmem:[%s293 + $0xc8] sm:$0xff] %v1401
        %1466 = vst [vmem:[%s293 + $0xd0] sm:$0xff] %v1402
        %1467 = vst [vmem:[%s293 + $0xd8] sm:$0xff] %v1403
        %1468 = vst [vmem:[%s293 + $0xe0] sm:$0xff] %v1404
        %1469 = vst [vmem:[%s293 + $0xe8] sm:$0xff] %v1405
        %1470 = vst [vmem:[%s293 + $0xf0] sm:$0xff] %v1406
        %1471 = vst [vmem:[%s293 + $0xf8] sm:$0xff] %v1407
        %s1472 = sand.u32 %s165, 1
        %s1473 = scalar_lea.sflag [#allocation5], %s1472
        %s1474 = sand.u32 %s165, 1
        %s1475 = smul.addr %s1474, 256
        %s1476 = scalar_lea.vmem [#allocation8], %s1475
        // Predicated region
        $region53: #{pernorm_forward.1} parent=39 // pred_check
          %p1477 = pneg %p175
        $region54: #{pernorm_forward.1} parent=39 // pred_check_branch
          %1479 = sbr.rel (%p1477) target = $region56
        $region55: #{pernorm_forward.1} parent=39 // pred_region
          %s1480 = smul.u32 32, %s27
          %s1481 = smul.u32 2, %s28
          %s1483 = ssub.s32 4096, 4096
          %1484 = vsyncadd %s1473, %s1483
          %s1485 = smul.addr %s1480, 2
          %s1486 = sadd.s32 %s1481, %s1485
          %s1487 = smul.addr %s1486, 64
          %s1488 = scalar_lea.hbm %s5, %s1487
          %s1489 = sshll.u32 %s1476, 4
          %s1490 = int_to_ptr.vmem [resolvable:$true] %s1489
          %1495 = dma.vmem_to_hbm [thread:$0]  %s1490, 4096, %s1488, %s1473, 128, 128, 8
        $region56: #{pernorm_forward.1} parent=39 // pred_fallthru
          _
      $region40: #{pernorm_forward.1} parent=5 // pred_fallthru
        _
      %p1496 = scmp.le.s32.totalorder 2, %s18
      // Predicated region
      $region57: #{pernorm_forward.1} parent=5 // pred_check
        %p1497 = pneg %p1496
      $region58: #{pernorm_forward.1} parent=5 // pred_check_branch
        %1499 = sbr.rel (%p1497) target = $region60
      $region59: #{pernorm_forward.1} parent=5 // pred_region
        %s1500 = ssub.s32 %s18, 2
        // Predicated region
        $region61: #{pernorm_forward.1} parent=59 // pred_check
          %p1501 = pneg %p181
        $region62: #{pernorm_forward.1} parent=59 // pred_check_branch
          %1503 = sbr.rel (%p1501) target = $region64
        $region63: #{pernorm_forward.1} parent=59 // pred_region
          %s1504 = sand.u32 %s166, 1
          %s1505 = scalar_lea.sflag [#allocation5], %s1504
          %s1506 = sand.u32 %s166, 1
          %s1507 = smul.addr %s1506, 256
          %s1508 = scalar_lea.vmem [#allocation8], %s1507
          %1509 = dma.done %s1505, 4096
        $region64: #{pernorm_forward.1} parent=59 // pred_fallthru
          _
      $region60: #{pernorm_forward.1} parent=5 // pred_fallthru
        _
    $region6: #{pernorm_forward.1} parent=1 // loop_footer
      %s22 = sadd.s32 1, %s18
    $region7: #{pernorm_forward.1} parent=1 // loop_footer_branch
      %17 = sbr.rel target = $region3
    $region8: #{pernorm_forward.1} parent=1 // loop_exit
      _
    %1510 = vsyncpa [#allocation4], 1
    %s1511 = scalar_lea.sflag [#allocation4], 1
    %1512 = vsyncpa %s1511, 1
    %1513 = vsyncpa [#allocation7], 1
    %1514 = vsyncpa [#allocation5], 1
    %s1515 = scalar_lea.sflag [#allocation5], 1
    %1516 = vsyncpa %s1515, 1

</llo_original>
